<compile_context>
chip_gen: v7x
topology: tpu7x:2x2x1
jax: 0.10.0
libtpu: 0.0.40
codegen_flags: <defaults>
</compile_context>

<pallas_src>
import functools

import jax
import jax.numpy as jnp
from jax.experimental import pallas as pl
from jax.experimental.pallas import tpu as pltpu


def _round_up(v, m):
    return ((v + m - 1) // m) * m


def _embed_kernel(n_layers, hp,
                  x_ref, a_ref, p_ref,
                  wpre_ref, bpre_ref,
                  w1_ref, b1_ref, w2_ref, b2_ref,
                  wpo1_ref, bpo1_ref, wpo2_ref, bpo2_ref,
                  out_ref, ph_ref):
    f32, bf16 = jnp.float32, jnp.bfloat16

    A = a_ref[...]            # [Np, Np] bf16, A + I (self term folded, eps = 0)
    P = p_ref[...]            # [Gp, Np] bf16, one-hot graph membership

    # pre: Linear(input_dim -> hidden_dim); MXU in bf16, accumulate / bias in f32.
    x = jnp.dot(x_ref[...], wpre_ref[...],
                preferred_element_type=f32) + bpre_ref[...]          # [Np, Hp] f32
    x_bf = x.astype(bf16)                                            # cast once
    # deferred post-linear: stash pooled per-layer embedding, contract later
    ph_ref[:, 0:hp] = jnp.dot(P, x_bf, preferred_element_type=f32)   # [Gp, Hp]

    xres = x
    for l in range(n_layers):                                        # static unroll (small L)
        h = jnp.dot(A, x_bf, preferred_element_type=f32)             # GIN agg: (A+I) @ x
        h = jnp.dot(h.astype(bf16), w1_ref[l],
                    preferred_element_type=f32) + b1_ref[l]
        h = jnp.maximum(h, 0.0)
        h = jnp.dot(h.astype(bf16), w2_ref[l],
                    preferred_element_type=f32) + b2_ref[l]
        if l & 1:                                                    # residual every other layer
            h = h + xres
            xres = h
        h = jnp.maximum(h, 0.0)
        h_bf = h.astype(bf16)                                        # cast once, reuse below
        ph_ref[:, (l + 1) * hp:(l + 2) * hp] = jnp.dot(
            P, h_bf, preferred_element_type=f32)
        x_bf = h_bf

    # post MLP on pooled embeddings: one big-K matmul vs W_post1, ReLU, output linear.
    pooled = jnp.dot(ph_ref[...].astype(bf16), wpo1_ref[...],
                     preferred_element_type=f32)                     # [Gp, Hp]
    y = jnp.maximum(pooled + bpo1_ref[...], 0.0)
    out_ref[...] = jnp.dot(y.astype(bf16), wpo2_ref[...],
                           preferred_element_type=f32) + bpo2_ref[...]


def _pad2(w, r, c, dt):
    return jnp.zeros((r, c), dt).at[:w.shape[0], :w.shape[1]].set(w.astype(dt))


def _pad3(w, r, c, dt):
    return jnp.zeros((w.shape[0], r, c), dt).at[:, :w.shape[1], :w.shape[2]].set(
        w.astype(dt))


def _prep_side(x, edge_index, batch, params, *, Np, Gp, Dp, Hp, Op, n_layers):
    """Padded per-side inputs (dense A, pooling matrix, padded weights)."""
    f32, bf16 = jnp.float32, jnp.bfloat16
    n_nodes = x.shape[0]
    hidden = params["W_pre"].shape[1]

    # Dense adjacency built directly in bf16 (exact for small integer edge counts),
    # self term folded in so aggregation is a single MXU op per layer.
    A = jnp.zeros((Np, Np), bf16)
    A = A.at[edge_index[1], edge_index[0]].add(
        jnp.ones((edge_index.shape[1],), bf16))
    diag = jnp.arange(n_nodes, dtype=jnp.int32)
    A = A.at[diag, diag].add(jnp.ones((n_nodes,), bf16))

    # One-hot pooling matrix P[graph, node]; padded nodes map to no graph.
    batch_p = jnp.full((Np,), -1, jnp.int32).at[:n_nodes].set(batch.astype(jnp.int32))
    P = (batch_p[None, :] == jnp.arange(Gp, dtype=jnp.int32)[:, None]).astype(bf16)

    x_p = _pad2(x, Np, Dp, bf16)

    # W_post1 rows are grouped per concatenated layer embedding; pad each block
    # to Hp so it matches the kernel's [Gp, (L+1)*Hp] pooled scratch layout.
    wpo1 = params["W_post1"].reshape(n_layers + 1, hidden, hidden)
    wpo1 = _pad3(wpo1, Hp, Hp, bf16).reshape((n_layers + 1) * Hp, Hp)

    return (
        x_p, A, P,
        _pad2(params["W_pre"], Dp, Hp, bf16),   _pad2(params["b_pre"], 1, Hp, f32),
        _pad3(params["W1"], Hp, Hp, bf16),      _pad3(params["b1"], 1, Hp, f32),
        _pad3(params["W2"], Hp, Hp, bf16),      _pad3(params["b2"], 1, Hp, f32),
        wpo1,                                   _pad2(params["b_post1"], 1, Hp, f32),
        _pad2(params["W_post2"], Hp, Op, bf16), _pad2(params["b_post2"], 1, Op, f32),
    )


def dual_siamese_forward(g, h, params_g, params_h, *, n_layers, num_graphs):
    """DualSiameseModel.forward: gx = embed_model_g(g); hx = embed_model_h(h).

    Both sides run in ONE pallas_call with a leading size-2 "parallel" grid axis.
    """
    # TODO(synk): DualSiameseModel.forward_emb is abstract (raises NotImplementedError
    # in the spec); we return the two embeddings, which is all the base class defines.
    f32 = jnp.float32
    (xg, eg, bg), (xh, eh, bh) = g, h
    input_dim = xg.shape[1]
    hidden_dim = params_g["W_pre"].shape[1]
    out_dim = params_g["W_post2"].shape[1]

    LANE, SUB = 128, 16                    # lane width / bf16 sublane packing
    Np = _round_up(max(xg.shape[0], xh.shape[0]), SUB)
    Gp = _round_up(num_graphs, SUB)        # 16: full bf16 sublane occupancy for P
    Dp = _round_up(input_dim, LANE)
    Hp = _round_up(hidden_dim, LANE)
    Op = _round_up(out_dim, LANE)

    sides = [
        _prep_side(xg, eg, bg, params_g, Np=Np, Gp=Gp, Dp=Dp, Hp=Hp, Op=Op,
                   n_layers=n_layers),
        _prep_side(xh, eh, bh, params_h, Np=Np, Gp=Gp, Dp=Dp, Hp=Hp, Op=Op,
                   n_layers=n_layers),
    ]
    inputs = tuple(jnp.stack([a, b], axis=0) for a, b in zip(*sides))

    # Leading side axis is the grid; each side's tile is the full per-side array
    # with the side dim squeezed out of the kernel refs.
    def spec(arr):
        return pl.BlockSpec((None,) + arr.shape[1:],
                            lambda s, _r=arr.ndim - 1: (s,) + (0,) * _r)

    in_specs = [spec(a) for a in inputs]
    out_spec = pl.BlockSpec((None, Gp, Op), lambda s: (s, 0, 0))

    # Generation-aware VMEM budget: double-buffered per-side input tiles + output
    # tiles + activation slabs + pooled scratch, capped below the chip's capacity.
    per_side_bytes = sum(int(a.nbytes) for a in inputs) // 2
    act_bytes = 6 * Np * Hp * 4 + Gp * (n_layers + 1) * Hp * 4
    want = 2 * per_side_bytes + 2 * Gp * Op * 4 + act_bytes + (4 << 20)
    try:
        vmem_cap = int(pltpu.get_tpu_info().vmem_capacity_bytes)
    except Exception:
        vmem_cap = 64 << 20                # conservative (v7x per-TC) fallback
    vmem_limit = int(min(max(want, 16 << 20), int(0.75 * vmem_cap)))

    L = n_layers
    flops_side = 2 * (Np * Dp * Hp                        # pre linear
                      + L * Np * Np * Hp                  # (A+I) @ x aggregation
                      + L * 2 * Np * Hp * Hp              # GIN MLPs
                      + (L + 1) * Gp * Np * Hp            # per-layer pooling
                      + Gp * (L + 1) * Hp * Hp            # deferred W_post1
                      + Gp * Hp * Op)                     # post linear 2
    bytes_accessed = sum(int(a.nbytes) for a in inputs) + 2 * Gp * Op * 4

    kernel = functools.partial(_embed_kernel, n_layers, Hp)
    out = pl.pallas_call(
        kernel,
        out_shape=jax.ShapeDtypeStruct((2, Gp, Op), f32),
        grid_spec=pltpu.PrefetchScalarGridSpec(
            num_scalar_prefetch=0,
            grid=(2,),
            in_specs=in_specs,
            out_specs=out_spec,
            scratch_shapes=[pltpu.VMEM((Gp, (n_layers + 1) * Hp), jnp.float32)]),
        compiler_params=pltpu.CompilerParams(
            dimension_semantics=("parallel",),            # 2 TCs on v7x; pipeline elsewhere
            vmem_limit_bytes=vmem_limit),
        cost_estimate=pl.CostEstimate(flops=int(2 * flops_side), transcendentals=0,
                                      bytes_accessed=int(bytes_accessed)),
    )(*inputs)

    gx = out[0, :num_graphs, :out_dim]
    hx = out[1, :num_graphs, :out_dim]
    return gx, hx


def embed_model_reference(x, edge_index, batch, params, *, n_layers, num_graphs,
                          mxu_dtype=jnp.float32):
    """Pure-JAX reference in the original (concat) formulation.  With
    mxu_dtype=bfloat16 the matmul operands are downcast exactly like the kernel."""
    f32 = jnp.float32

    def mm(a, b):
        return jnp.dot(a.astype(mxu_dtype), b.astype(mxu_dtype),
                       preferred_element_type=f32)

    n_nodes = x.shape[0]
    A = jnp.zeros((n_nodes, n_nodes), f32).at[edge_index[1], edge_index[0]].add(1.0)
    A = A + jnp.eye(n_nodes, dtype=f32)
    P = (batch[None, :] == jnp.arange(num_graphs)[:, None]).astype(f32)

    h = mm(x, params["W_pre"]) + params["b_pre"]
    emb, xres = h, h
    for l in range(n_layers):
        z = mm(A, h)
        z = jnp.maximum(mm(z, params["W1"][l]) + params["b1"][l], 0.0)
        z = mm(z, params["W2"][l]) + params["b2"][l]
        if l & 1:
            z = z + xres
            xres = z
        z = jnp.maximum(z, 0.0)
        emb = jnp.concatenate([emb, z], axis=1)
        h = z
    pooled = mm(P, emb)
    y = jnp.maximum(mm(pooled, params["W_post1"]) + params["b_post1"], 0.0)
    return mm(y, params["W_post2"]) + params["b_post2"]


def make_params(key, n_layers, input_dim, hidden_dim, output_dim):
    ks = jax.random.split(key, 10)
    emb_dim = hidden_dim * (n_layers + 1)

    def init(k, shape):
        return (0.1 * jax.random.normal(k, shape)).astype(jnp.float32)

    return {
        "W_pre":   init(ks[0], (input_dim, hidden_dim)),
        "b_pre":   init(ks[1], (1, hidden_dim)),
        "W1":      init(ks[2], (n_layers, hidden_dim, hidden_dim)),
        "b1":      init(ks[3], (n_layers, 1, hidden_dim)),
        "W2":      init(ks[4], (n_layers, hidden_dim, hidden_dim)),
        "b2":      init(ks[5], (n_layers, 1, hidden_dim)),
        "W_post1": init(ks[6], (emb_dim, hidden_dim)),
        "b_post1": init(ks[7], (1, hidden_dim)),
        "W_post2": init(ks[8], (hidden_dim, output_dim)),
        "b_post2": init(ks[9], (1, output_dim)),
    }


if __name__ == "__main__":
    # Small config: 2 graphs of 8 nodes each (16 nodes total) per side.
    n_layers, input_dim, hidden_dim, output_dim = 2, 8, 32, 8
    num_graphs, nodes_per_graph = 2, 8
    n_nodes = num_graphs * nodes_per_graph

    key = jax.random.PRNGKey(0)
    k_xg, k_xh, k_pg, k_ph = jax.random.split(key, 4)

    def ring_batch(k_x):
        x = jax.random.normal(k_x, (n_nodes, input_dim), dtype=jnp.float32)
        src, dst = [], []
        for gi in range(num_graphs):
            base = gi * nodes_per_graph
            for i in range(nodes_per_graph):
                a, b = base + i, base + (i + 1) % nodes_per_graph
                src += [a, b]
                dst += [b, a]
        edge_index = jnp.array([src, dst], dtype=jnp.int32)        # [2, E]
        batch = jnp.repeat(jnp.arange(num_graphs, dtype=jnp.int32), nodes_per_graph)
        return x, edge_index, batch

    g = ring_batch(k_xg)
    h = ring_batch(k_xh)
    params_g = make_params(k_pg, n_layers, input_dim, hidden_dim, output_dim)
    params_h = make_params(k_ph, n_layers, input_dim, hidden_dim, output_dim)

    gx, hx = dual_siamese_forward(g, h, params_g, params_h,
                                  n_layers=n_layers, num_graphs=num_graphs)
    gx, hx = jax.block_until_ready((gx, hx))

    for out, (xx, ei, bt), params in ((gx, g, params_g), (hx, h, params_h)):
        assert out.shape == (num_graphs, output_dim)
        ref_bf16 = embed_model_reference(xx, ei, bt, params, n_layers=n_layers,
                                         num_graphs=num_graphs,
                                         mxu_dtype=jnp.bfloat16)
        ref_f32 = embed_model_reference(xx, ei, bt, params, n_layers=n_layers,
                                        num_graphs=num_graphs)
        assert jnp.allclose(out, ref_bf16, atol=1e-2, rtol=1e-2), \
            "mismatch vs bf16-matched reference"
        assert jnp.allclose(out, ref_f32, atol=1e-1, rtol=1e-1), \
            "mismatch vs f32 reference"

    print("KERNEL_OK")
</pallas_src>

<mosaic_0001>
module attributes {stable_mosaic.version = 11 : i64} {
  func.func @_embed_kernel(%arg0: i32, %arg1: memref<1x16x128xbf16, #tpu.memory_space<vmem>>, %arg2: memref<1x16x16xbf16, #tpu.memory_space<vmem>>, %arg3: memref<1x16x16xbf16, #tpu.memory_space<vmem>>, %arg4: memref<1x128x128xbf16, #tpu.memory_space<vmem>>, %arg5: memref<1x1x128xf32, #tpu.memory_space<vmem>>, %arg6: memref<1x2x128x128xbf16, #tpu.memory_space<vmem>>, %arg7: memref<1x2x1x128xf32, #tpu.memory_space<vmem>>, %arg8: memref<1x2x128x128xbf16, #tpu.memory_space<vmem>>, %arg9: memref<1x2x1x128xf32, #tpu.memory_space<vmem>>, %arg10: memref<1x384x128xbf16, #tpu.memory_space<vmem>>, %arg11: memref<1x1x128xf32, #tpu.memory_space<vmem>>, %arg12: memref<1x128x128xbf16, #tpu.memory_space<vmem>>, %arg13: memref<1x1x128xf32, #tpu.memory_space<vmem>>, %arg14: memref<1x16x128xf32, #tpu.memory_space<vmem>>, %arg15: memref<16x384xf32, #tpu.memory_space<vmem>>) attributes {dimension_semantics = [#tpu.dimension_semantics<parallel>], iteration_bounds = array<i64: 2>, scalar_prefetch = 0 : i64, scratch_operands = 1 : i64, tpu.core_type = #tpu.core_type<tc>, window_params = [{transform_indices = @transform_0, window_bounds = array<i64: 1, 16, 128>}, {transform_indices = @transform_1, window_bounds = array<i64: 1, 16, 16>}, {transform_indices = @transform_2, window_bounds = array<i64: 1, 16, 16>}, {transform_indices = @transform_3, window_bounds = array<i64: 1, 128, 128>}, {transform_indices = @transform_4, window_bounds = array<i64: 1, 1, 128>}, {transform_indices = @transform_5, window_bounds = array<i64: 1, 2, 128, 128>}, {transform_indices = @transform_6, window_bounds = array<i64: 1, 2, 1, 128>}, {transform_indices = @transform_7, window_bounds = array<i64: 1, 2, 128, 128>}, {transform_indices = @transform_8, window_bounds = array<i64: 1, 2, 1, 128>}, {transform_indices = @transform_9, window_bounds = array<i64: 1, 384, 128>}, {transform_indices = @transform_10, window_bounds = array<i64: 1, 1, 128>}, {transform_indices = @transform_11, window_bounds = array<i64: 1, 128, 128>}, {transform_indices = @transform_12, window_bounds = array<i64: 1, 1, 128>}, {transform_indices = @transform_13, window_bounds = array<i64: 1, 16, 128>}]} {
    %c0 = arith.constant 0 : index
    %c0_0 = arith.constant 0 : index
    %c0_1 = arith.constant 0 : index
    %0 = vector.load %arg2[%c0, %c0_0, %c0_1] : memref<1x16x16xbf16, #tpu.memory_space<vmem>>, vector<1x16x16xbf16>
    %1 = vector.shape_cast %0 : vector<1x16x16xbf16> to vector<16x16xbf16>
    %c0_2 = arith.constant 0 : index
    %c0_3 = arith.constant 0 : index
    %c0_4 = arith.constant 0 : index
    %2 = vector.load %arg3[%c0_2, %c0_3, %c0_4] : memref<1x16x16xbf16, #tpu.memory_space<vmem>>, vector<1x16x16xbf16>
    %3 = vector.shape_cast %2 : vector<1x16x16xbf16> to vector<16x16xbf16>
    %c0_5 = arith.constant 0 : index
    %c0_6 = arith.constant 0 : index
    %c0_7 = arith.constant 0 : index
    %4 = vector.load %arg1[%c0_5, %c0_6, %c0_7] : memref<1x16x128xbf16, #tpu.memory_space<vmem>>, vector<1x16x128xbf16>
    %5 = vector.shape_cast %4 : vector<1x16x128xbf16> to vector<16x128xbf16>
    %c0_8 = arith.constant 0 : index
    %c0_9 = arith.constant 0 : index
    %c0_10 = arith.constant 0 : index
    %6 = vector.load %arg4[%c0_8, %c0_9, %c0_10] : memref<1x128x128xbf16, #tpu.memory_space<vmem>>, vector<1x128x128xbf16>
    %7 = vector.shape_cast %6 : vector<1x128x128xbf16> to vector<128x128xbf16>
    %cst = arith.constant dense<0.000000e+00> : vector<16x128xf32>
    %8 = tpu.matmul %5, %7, %cst {dimension_numbers = #tpu.dot_dimension_numbers<[1], [0], [0], [1], [0, 0, 1, 1], [], []>} : vector<16x128xbf16>, vector<128x128xbf16>, vector<16x128xf32> -> vector<16x128xf32>
    %c0_11 = arith.constant 0 : index
    %c0_12 = arith.constant 0 : index
    %c0_13 = arith.constant 0 : index
    %9 = vector.load %arg5[%c0_11, %c0_12, %c0_13] : memref<1x1x128xf32, #tpu.memory_space<vmem>>, vector<1x1x128xf32>
    %10 = vector.shape_cast %9 : vector<1x1x128xf32> to vector<1x128xf32>
    %11 = vector.broadcast %10 : vector<1x128xf32> to vector<16x128xf32>
    %12 = arith.addf %8, %11 : vector<16x128xf32>
    %13 = arith.truncf %12 : vector<16x128xf32> to vector<16x128xbf16>
    %cst_14 = arith.constant dense<0.000000e+00> : vector<16x128xf32>
    %14 = tpu.matmul %3, %13, %cst_14 {dimension_numbers = #tpu.dot_dimension_numbers<[1], [0], [0], [1], [0, 0, 1, 1], [], []>} : vector<16x16xbf16>, vector<16x128xbf16>, vector<16x128xf32> -> vector<16x128xf32>
    %c0_15 = arith.constant 0 : index
    %c0_16 = arith.constant 0 : index
    %15 = vector.load %arg15[%c0_15, %c0_16] : memref<16x384xf32, #tpu.memory_space<vmem>>, vector<16x128xf32>
    tpu.vector_store %arg15[%c0_15, %c0_16], %14 {strides = array<i32>} : memref<16x384xf32, #tpu.memory_space<vmem>>, vector<16x128xf32>,
    %cst_17 = arith.constant dense<0.000000e+00> : vector<16x128xf32>
    %16 = tpu.matmul %1, %13, %cst_17 {dimension_numbers = #tpu.dot_dimension_numbers<[1], [0], [0], [1], [0, 0, 1, 1], [], []>} : vector<16x16xbf16>, vector<16x128xbf16>, vector<16x128xf32> -> vector<16x128xf32>
    %17 = arith.truncf %16 : vector<16x128xf32> to vector<16x128xbf16>
    %c0_18 = arith.constant 0 : index
    %c0_19 = arith.constant 0 : index
    %c0_20 = arith.constant 0 : index
    %c0_21 = arith.constant 0 : index
    %18 = vector.load %arg6[%c0_18, %c0_19, %c0_20, %c0_21] : memref<1x2x128x128xbf16, #tpu.memory_space<vmem>>, vector<1x1x128x128xbf16>
    %19 = vector.shape_cast %18 : vector<1x1x128x128xbf16> to vector<128x128xbf16>
    %cst_22 = arith.constant dense<0.000000e+00> : vector<16x128xf32>
    %20 = tpu.matmul %17, %19, %cst_22 {dimension_numbers = #tpu.dot_dimension_numbers<[1], [0], [0], [1], [0, 0, 1, 1], [], []>} : vector<16x128xbf16>, vector<128x128xbf16>, vector<16x128xf32> -> vector<16x128xf32>
    %c0_23 = arith.constant 0 : index
    %c0_24 = arith.constant 0 : index
    %c0_25 = arith.constant 0 : index
    %c0_26 = arith.constant 0 : index
    %21 = vector.load %arg7[%c0_23, %c0_24, %c0_25, %c0_26] : memref<1x2x1x128xf32, #tpu.memory_space<vmem>>, vector<1x1x1x128xf32>
    %22 = vector.shape_cast %21 : vector<1x1x1x128xf32> to vector<1x128xf32>
    %23 = vector.broadcast %22 : vector<1x128xf32> to vector<16x128xf32>
    %24 = arith.addf %20, %23 : vector<16x128xf32>
    %cst_27 = arith.constant 0.000000e+00 : f32
    %25 = vector.broadcast %cst_27 : f32 to vector<16x128xf32>
    %26 = arith.maximumf %24, %25 : vector<16x128xf32>
    %27 = arith.truncf %26 : vector<16x128xf32> to vector<16x128xbf16>
    %c0_28 = arith.constant 0 : index
    %c0_29 = arith.constant 0 : index
    %c0_30 = arith.constant 0 : index
    %c0_31 = arith.constant 0 : index
    %28 = vector.load %arg8[%c0_28, %c0_29, %c0_30, %c0_31] : memref<1x2x128x128xbf16, #tpu.memory_space<vmem>>, vector<1x1x128x128xbf16>
    %29 = vector.shape_cast %28 : vector<1x1x128x128xbf16> to vector<128x128xbf16>
    %cst_32 = arith.constant dense<0.000000e+00> : vector<16x128xf32>
    %30 = tpu.matmul %27, %29, %cst_32 {dimension_numbers = #tpu.dot_dimension_numbers<[1], [0], [0], [1], [0, 0, 1, 1], [], []>} : vector<16x128xbf16>, vector<128x128xbf16>, vector<16x128xf32> -> vector<16x128xf32>
    %c0_33 = arith.constant 0 : index
    %c0_34 = arith.constant 0 : index
    %c0_35 = arith.constant 0 : index
    %c0_36 = arith.constant 0 : index
    %31 = vector.load %arg9[%c0_33, %c0_34, %c0_35, %c0_36] : memref<1x2x1x128xf32, #tpu.memory_space<vmem>>, vector<1x1x1x128xf32>
    %32 = vector.shape_cast %31 : vector<1x1x1x128xf32> to vector<1x128xf32>
    %33 = vector.broadcast %32 : vector<1x128xf32> to vector<16x128xf32>
    %34 = arith.addf %30, %33 : vector<16x128xf32>
    %cst_37 = arith.constant 0.000000e+00 : f32
    %35 = vector.broadcast %cst_37 : f32 to vector<16x128xf32>
    %36 = arith.maximumf %34, %35 : vector<16x128xf32>
    %37 = arith.truncf %36 : vector<16x128xf32> to vector<16x128xbf16>
    %cst_38 = arith.constant dense<0.000000e+00> : vector<16x128xf32>
    %38 = tpu.matmul %3, %37, %cst_38 {dimension_numbers = #tpu.dot_dimension_numbers<[1], [0], [0], [1], [0, 0, 1, 1], [], []>} : vector<16x16xbf16>, vector<16x128xbf16>, vector<16x128xf32> -> vector<16x128xf32>
    %c0_39 = arith.constant 0 : index
    %c128 = arith.constant 128 : index
    %39 = vector.load %arg15[%c0_39, %c128] : memref<16x384xf32, #tpu.memory_space<vmem>>, vector<16x128xf32>
    tpu.vector_store %arg15[%c0_39, %c128], %38 {strides = array<i32>} : memref<16x384xf32, #tpu.memory_space<vmem>>, vector<16x128xf32>,
    %cst_40 = arith.constant dense<0.000000e+00> : vector<16x128xf32>
    %40 = tpu.matmul %1, %37, %cst_40 {dimension_numbers = #tpu.dot_dimension_numbers<[1], [0], [0], [1], [0, 0, 1, 1], [], []>} : vector<16x16xbf16>, vector<16x128xbf16>, vector<16x128xf32> -> vector<16x128xf32>
    %41 = arith.truncf %40 : vector<16x128xf32> to vector<16x128xbf16>
    %c0_41 = arith.constant 0 : index
    %c1 = arith.constant 1 : index
    %c0_42 = arith.constant 0 : index
    %c0_43 = arith.constant 0 : index
    %42 = vector.load %arg6[%c0_41, %c1, %c0_42, %c0_43] : memref<1x2x128x128xbf16, #tpu.memory_space<vmem>>, vector<1x1x128x128xbf16>
    %43 = vector.shape_cast %42 : vector<1x1x128x128xbf16> to vector<128x128xbf16>
    %cst_44 = arith.constant dense<0.000000e+00> : vector<16x128xf32>
    %44 = tpu.matmul %41, %43, %cst_44 {dimension_numbers = #tpu.dot_dimension_numbers<[1], [0], [0], [1], [0, 0, 1, 1], [], []>} : vector<16x128xbf16>, vector<128x128xbf16>, vector<16x128xf32> -> vector<16x128xf32>
    %c0_45 = arith.constant 0 : index
    %c1_46 = arith.constant 1 : index
    %c0_47 = arith.constant 0 : index
    %c0_48 = arith.constant 0 : index
    %45 = vector.load %arg7[%c0_45, %c1_46, %c0_47, %c0_48] : memref<1x2x1x128xf32, #tpu.memory_space<vmem>>, vector<1x1x1x128xf32>
    %46 = vector.shape_cast %45 : vector<1x1x1x128xf32> to vector<1x128xf32>
    %47 = vector.broadcast %46 : vector<1x128xf32> to vector<16x128xf32>
    %48 = arith.addf %44, %47 : vector<16x128xf32>
    %cst_49 = arith.constant 0.000000e+00 : f32
    %49 = vector.broadcast %cst_49 : f32 to vector<16x128xf32>
    %50 = arith.maximumf %48, %49 : vector<16x128xf32>
    %51 = arith.truncf %50 : vector<16x128xf32> to vector<16x128xbf16>
    %c0_50 = arith.constant 0 : index
    %c1_51 = arith.constant 1 : index
    %c0_52 = arith.constant 0 : index
    %c0_53 = arith.constant 0 : index
    %52 = vector.load %arg8[%c0_50, %c1_51, %c0_52, %c0_53] : memref<1x2x128x128xbf16, #tpu.memory_space<vmem>>, vector<1x1x128x128xbf16>
    %53 = vector.shape_cast %52 : vector<1x1x128x128xbf16> to vector<128x128xbf16>
    %cst_54 = arith.constant dense<0.000000e+00> : vector<16x128xf32>
    %54 = tpu.matmul %51, %53, %cst_54 {dimension_numbers = #tpu.dot_dimension_numbers<[1], [0], [0], [1], [0, 0, 1, 1], [], []>} : vector<16x128xbf16>, vector<128x128xbf16>, vector<16x128xf32> -> vector<16x128xf32>
    %c0_55 = arith.constant 0 : index
    %c1_56 = arith.constant 1 : index
    %c0_57 = arith.constant 0 : index
    %c0_58 = arith.constant 0 : index
    %55 = vector.load %arg9[%c0_55, %c1_56, %c0_57, %c0_58] : memref<1x2x1x128xf32, #tpu.memory_space<vmem>>, vector<1x1x1x128xf32>
    %56 = vector.shape_cast %55 : vector<1x1x1x128xf32> to vector<1x128xf32>
    %57 = vector.broadcast %56 : vector<1x128xf32> to vector<16x128xf32>
    %58 = arith.addf %54, %57 : vector<16x128xf32>
    %59 = arith.addf %58, %12 : vector<16x128xf32>
    %cst_59 = arith.constant 0.000000e+00 : f32
    %60 = vector.broadcast %cst_59 : f32 to vector<16x128xf32>
    %61 = arith.maximumf %59, %60 : vector<16x128xf32>
    %62 = arith.truncf %61 : vector<16x128xf32> to vector<16x128xbf16>
    %cst_60 = arith.constant dense<0.000000e+00> : vector<16x128xf32>
    %63 = tpu.matmul %3, %62, %cst_60 {dimension_numbers = #tpu.dot_dimension_numbers<[1], [0], [0], [1], [0, 0, 1, 1], [], []>} : vector<16x16xbf16>, vector<16x128xbf16>, vector<16x128xf32> -> vector<16x128xf32>
    %c0_61 = arith.constant 0 : index
    %c256 = arith.constant 256 : index
    %64 = vector.load %arg15[%c0_61, %c256] : memref<16x384xf32, #tpu.memory_space<vmem>>, vector<16x128xf32>
    tpu.vector_store %arg15[%c0_61, %c256], %63 {strides = array<i32>} : memref<16x384xf32, #tpu.memory_space<vmem>>, vector<16x128xf32>,
    %c0_62 = arith.constant 0 : index
    %c0_63 = arith.constant 0 : index
    %65 = vector.load %arg15[%c0_62, %c0_63] : memref<16x384xf32, #tpu.memory_space<vmem>>, vector<16x384xf32>
    %66 = arith.truncf %65 : vector<16x384xf32> to vector<16x384xbf16>
    %c0_64 = arith.constant 0 : index
    %c0_65 = arith.constant 0 : index
    %c0_66 = arith.constant 0 : index
    %67 = vector.load %arg10[%c0_64, %c0_65, %c0_66] : memref<1x384x128xbf16, #tpu.memory_space<vmem>>, vector<1x384x128xbf16>
    %68 = vector.shape_cast %67 : vector<1x384x128xbf16> to vector<384x128xbf16>
    %cst_67 = arith.constant dense<0.000000e+00> : vector<16x128xf32>
    %69 = tpu.matmul %66, %68, %cst_67 {dimension_numbers = #tpu.dot_dimension_numbers<[1], [0], [0], [1], [0, 0, 1, 1], [], []>} : vector<16x384xbf16>, vector<384x128xbf16>, vector<16x128xf32> -> vector<16x128xf32>
    %c0_68 = arith.constant 0 : index
    %c0_69 = arith.constant 0 : index
    %c0_70 = arith.constant 0 : index
    %70 = vector.load %arg11[%c0_68, %c0_69, %c0_70] : memref<1x1x128xf32, #tpu.memory_space<vmem>>, vector<1x1x128xf32>
    %71 = vector.shape_cast %70 : vector<1x1x128xf32> to vector<1x128xf32>
    %72 = vector.broadcast %71 : vector<1x128xf32> to vector<16x128xf32>
    %73 = arith.addf %69, %72 : vector<16x128xf32>
    %cst_71 = arith.constant 0.000000e+00 : f32
    %74 = vector.broadcast %cst_71 : f32 to vector<16x128xf32>
    %75 = arith.maximumf %73, %74 : vector<16x128xf32>
    %76 = arith.truncf %75 : vector<16x128xf32> to vector<16x128xbf16>
    %c0_72 = arith.constant 0 : index
    %c0_73 = arith.constant 0 : index
    %c0_74 = arith.constant 0 : index
    %77 = vector.load %arg12[%c0_72, %c0_73, %c0_74] : memref<1x128x128xbf16, #tpu.memory_space<vmem>>, vector<1x128x128xbf16>
    %78 = vector.shape_cast %77 : vector<1x128x128xbf16> to vector<128x128xbf16>
    %cst_75 = arith.constant dense<0.000000e+00> : vector<16x128xf32>
    %79 = tpu.matmul %76, %78, %cst_75 {dimension_numbers = #tpu.dot_dimension_numbers<[1], [0], [0], [1], [0, 0, 1, 1], [], []>} : vector<16x128xbf16>, vector<128x128xbf16>, vector<16x128xf32> -> vector<16x128xf32>
    %c0_76 = arith.constant 0 : index
    %c0_77 = arith.constant 0 : index
    %c0_78 = arith.constant 0 : index
    %80 = vector.load %arg13[%c0_76, %c0_77, %c0_78] : memref<1x1x128xf32, #tpu.memory_space<vmem>>, vector<1x1x128xf32>
    %81 = vector.shape_cast %80 : vector<1x1x128xf32> to vector<1x128xf32>
    %82 = vector.broadcast %81 : vector<1x128xf32> to vector<16x128xf32>
    %83 = arith.addf %79, %82 : vector<16x128xf32>
    %c0_79 = arith.constant 0 : index
    %c0_80 = arith.constant 0 : index
    %c0_81 = arith.constant 0 : index
    %84 = vector.load %arg14[%c0_79, %c0_80, %c0_81] : memref<1x16x128xf32, #tpu.memory_space<vmem>>, vector<1x16x128xf32>
    %85 = vector.shape_cast %84 : vector<1x16x128xf32> to vector<16x128xf32>
    %86 = vector.shape_cast %83 : vector<16x128xf32> to vector<1x16x128xf32>
    tpu.vector_store %arg14[%c0_79, %c0_80, %c0_81], %86 {strides = array<i32>} : memref<1x16x128xf32, #tpu.memory_space<vmem>>, vector<1x16x128xf32>,
    return
  }
  func.func @transform_0(%arg0: i32) -> (i32, i32, i32) {
    %c0_i32 = arith.constant 0 : i32
    %c0_i32_0 = arith.constant 0 : i32
    %c0_i32_1 = arith.constant 0 : i32
    return %arg0, %c0_i32, %c0_i32_0 : i32, i32, i32
  }
  func.func @transform_1(%arg0: i32) -> (i32, i32, i32) {
    %c0_i32 = arith.constant 0 : i32
    %c0_i32_0 = arith.constant 0 : i32
    %c0_i32_1 = arith.constant 0 : i32
    return %arg0, %c0_i32, %c0_i32_0 : i32, i32, i32
  }
  func.func @transform_2(%arg0: i32) -> (i32, i32, i32) {
    %c0_i32 = arith.constant 0 : i32
    %c0_i32_0 = arith.constant 0 : i32
    %c0_i32_1 = arith.constant 0 : i32
    return %arg0, %c0_i32, %c0_i32_0 : i32, i32, i32
  }
  func.func @transform_3(%arg0: i32) -> (i32, i32, i32) {
    %c0_i32 = arith.constant 0 : i32
    %c0_i32_0 = arith.constant 0 : i32
    %c0_i32_1 = arith.constant 0 : i32
    return %arg0, %c0_i32, %c0_i32_0 : i32, i32, i32
  }
  func.func @transform_4(%arg0: i32) -> (i32, i32, i32) {
    %c0_i32 = arith.constant 0 : i32
    %c0_i32_0 = arith.constant 0 : i32
    %c0_i32_1 = arith.constant 0 : i32
    return %arg0, %c0_i32, %c0_i32_0 : i32, i32, i32
  }
  func.func @transform_5(%arg0: i32) -> (i32, i32, i32, i32) {
    %c0_i32 = arith.constant 0 : i32
    %c0_i32_0 = arith.constant 0 : i32
    %c0_i32_1 = arith.constant 0 : i32
    %c0_i32_2 = arith.constant 0 : i32
    return %arg0, %c0_i32, %c0_i32_0, %c0_i32_1 : i32, i32, i32, i32
  }
  func.func @transform_6(%arg0: i32) -> (i32, i32, i32, i32) {
    %c0_i32 = arith.constant 0 : i32
    %c0_i32_0 = arith.constant 0 : i32
    %c0_i32_1 = arith.constant 0 : i32
    %c0_i32_2 = arith.constant 0 : i32
    return %arg0, %c0_i32, %c0_i32_0, %c0_i32_1 : i32, i32, i32, i32
  }
  func.func @transform_7(%arg0: i32) -> (i32, i32, i32, i32) {
    %c0_i32 = arith.constant 0 : i32
    %c0_i32_0 = arith.constant 0 : i32
    %c0_i32_1 = arith.constant 0 : i32
    %c0_i32_2 = arith.constant 0 : i32
    return %arg0, %c0_i32, %c0_i32_0, %c0_i32_1 : i32, i32, i32, i32
  }
  func.func @transform_8(%arg0: i32) -> (i32, i32, i32, i32) {
    %c0_i32 = arith.constant 0 : i32
    %c0_i32_0 = arith.constant 0 : i32
    %c0_i32_1 = arith.constant 0 : i32
    %c0_i32_2 = arith.constant 0 : i32
    return %arg0, %c0_i32, %c0_i32_0, %c0_i32_1 : i32, i32, i32, i32
  }
  func.func @transform_9(%arg0: i32) -> (i32, i32, i32) {
    %c0_i32 = arith.constant 0 : i32
    %c0_i32_0 = arith.constant 0 : i32
    %c0_i32_1 = arith.constant 0 : i32
    return %arg0, %c0_i32, %c0_i32_0 : i32, i32, i32
  }
  func.func @transform_10(%arg0: i32) -> (i32, i32, i32) {
    %c0_i32 = arith.constant 0 : i32
    %c0_i32_0 = arith.constant 0 : i32
    %c0_i32_1 = arith.constant 0 : i32
    return %arg0, %c0_i32, %c0_i32_0 : i32, i32, i32
  }
  func.func @transform_11(%arg0: i32) -> (i32, i32, i32) {
    %c0_i32 = arith.constant 0 : i32
    %c0_i32_0 = arith.constant 0 : i32
    %c0_i32_1 = arith.constant 0 : i32
    return %arg0, %c0_i32, %c0_i32_0 : i32, i32, i32
  }
  func.func @transform_12(%arg0: i32) -> (i32, i32, i32) {
    %c0_i32 = arith.constant 0 : i32
    %c0_i32_0 = arith.constant 0 : i32
    %c0_i32_1 = arith.constant 0 : i32
    return %arg0, %c0_i32, %c0_i32_0 : i32, i32, i32
  }
  func.func @transform_13(%arg0: i32) -> (i32, i32, i32) {
    %c0_i32 = arith.constant 0 : i32
    %c0_i32_0 = arith.constant 0 : i32
    %c0_i32_1 = arith.constant 0 : i32
    return %arg0, %c0_i32, %c0_i32_0 : i32, i32, i32
  }
}

</mosaic_0001>

<llo_original>
// kernel: tpu_custom_call.1
$region0: #{tpu_custom_call.1}
  #allocation0 [shape = 'u32[]', space=smem, size = 0x4, offset = 0x4, fixed_abs, tag = 'smem constant byte address 0x4 - core index']
  #allocation1 [shape = 'u32[144,128]{1,0:T(1,128)}', space=vmem, size = 0x12000, scoped, tag = 'internal scratch']
  #allocation2 [shape = 'f32[16,384]{1,0:T(8,128)}', space=vmem, size = 0x6000, scoped, tag = 'scratch operand']
  %s0 = inlined_call_operand.hbm [shape: bf16[2,16,128], index: 0, kind: input, shape index: {}]
  %s1 = inlined_call_operand.hbm [shape: bf16[2,16,16], index: 1, kind: input, shape index: {}]
  %s2 = inlined_call_operand.hbm [shape: bf16[2,16,16], index: 2, kind: input, shape index: {}]
  %s3 = inlined_call_operand.hbm [shape: bf16[2,128,128], index: 3, kind: input, shape index: {}]
  %s4 = inlined_call_operand.vmem [shape: f32[2,1,128], index: 4, kind: input, shape index: {}]
  %s5 = inlined_call_operand.hbm [shape: bf16[2,2,128,128], index: 5, kind: input, shape index: {}]
  %s6 = inlined_call_operand.vmem [shape: f32[2,2,1,128], index: 6, kind: input, shape index: {}]
  %s7 = inlined_call_operand.hbm [shape: bf16[2,2,128,128], index: 7, kind: input, shape index: {}]
  %s8 = inlined_call_operand.vmem [shape: f32[2,2,1,128], index: 8, kind: input, shape index: {}]
  %s9 = inlined_call_operand.hbm [shape: bf16[2,384,128], index: 9, kind: input, shape index: {}]
  %s10 = inlined_call_operand.vmem [shape: f32[2,1,128], index: 10, kind: input, shape index: {}]
  %s11 = inlined_call_operand.hbm [shape: bf16[2,128,128], index: 11, kind: input, shape index: {}]
  %s12 = inlined_call_operand.vmem [shape: f32[2,1,128], index: 12, kind: input, shape index: {}]
  %s13 = inlined_call_operand.hbm [shape: f32[2,16,128], index: 13, kind: output, shape index: {}]
  %s14 = sld [smem:[#allocation0]]
  $region117: #{tpu_custom_call.1} parent=0
    _
  %s16 = ssub.s32 1, %s14
  %s17 = scalar_select 0, %s16, %s14
  $region1: #{tpu_custom_call.1} parent=0
    #allocation3 [shape = 'u8[8192]{0}', space=vmem, size = 0x2000, scoped, tag = 'input window, operand 0']
    #allocation4 [shape = 's32[2]{0}', space=sflag, size = 0x8, scoped, tag = 'scoped memory for tpu_custom_call.1']
    #allocation5 [shape = 's32[2]{0}', space=sflag, size = 0x8, scoped, tag = 'scoped memory for tpu_custom_call.1']
    #allocation6 [shape = 'u8[8192]{0}', space=vmem, size = 0x2000, scoped, tag = 'input window, operand 1']
    #allocation7 [shape = 's32[2]{0}', space=sflag, size = 0x8, scoped, tag = 'scoped memory for tpu_custom_call.1']
    #allocation8 [shape = 'u8[8192]{0}', space=vmem, size = 0x2000, scoped, tag = 'input window, operand 2']
    #allocation9 [shape = 'u8[65536]{0}', space=vmem, size = 0x10000, scoped, tag = 'input window, operand 3']
    #allocation10 [shape = 's32[2]{0}', space=sflag, size = 0x8, scoped, tag = 'scoped memory for tpu_custom_call.1']
    #allocation11 [shape = 'u8[131072]{0}', space=vmem, size = 0x20000, scoped, tag = 'input window, operand 5']
    #allocation12 [shape = 'u8[131072]{0}', space=vmem, size = 0x20000, scoped, tag = 'input window, operand 7']
    #allocation13 [shape = 's32[2]{0}', space=sflag, size = 0x8, scoped, tag = 'scoped memory for tpu_custom_call.1']
    #allocation14 [shape = 'u8[196608]{0}', space=vmem, size = 0x30000, scoped, tag = 'input window, operand 9']
    #allocation15 [shape = 'u8[65536]{0}', space=vmem, size = 0x10000, scoped, tag = 'input window, operand 11']
    #allocation16 [shape = 's32[2]{0}', space=sflag, size = 0x8, scoped, tag = 'scoped memory for tpu_custom_call.1']
    #allocation17 [shape = 'u8[16384]{0}', space=vmem, size = 0x4000, scoped, tag = 'output window, operand 0']
    %18 = vsyncpa [#allocation4], 0
    %s19 = scalar_lea.sflag [#allocation4], 1
    %20 = vsyncpa %s19, 0
    %21 = vsyncpa [#allocation7], 0
    %s22 = scalar_lea.sflag [#allocation7], 1
    %23 = vsyncpa %s22, 0
    %24 = vsyncpa [#allocation10], 0
    %s25 = scalar_lea.sflag [#allocation10], 1
    %26 = vsyncpa %s25, 0
    %27 = vsyncpa [#allocation13], 0
    %s28 = scalar_lea.sflag [#allocation13], 1
    %29 = vsyncpa %s28, 0
    %30 = vsyncpa [#allocation16], 0
    %s31 = scalar_lea.sflag [#allocation16], 1
    %32 = vsyncpa %s31, 0
    %33 = vsyncpa [#allocation5], 0
    %s34 = scalar_lea.sflag [#allocation5], 1
    %35 = vsyncpa %s34, 0
    loop: start=0, step=1, limit=4
    $region2: #{tpu_custom_call.1} parent=1 // loop_pre_header
      _
    $region3: #{tpu_custom_call.1} parent=1 // loop_header
      %s37 = sphi 0, %s41
      %p38 = scmp.ge.s32.totalorder %s37, 4
      %s47 = sphi 0, %s49
      %s50 = sphi 0, %s47
      %s51 = sphi 0, %s50
      %s67 = sphi 0, %s51
      %s73 = sphi 0, %s75
      %s76 = sphi 0, %s73
      %s77 = sphi 0, %s76
      %s93 = sphi 0, %s77
      %s99 = sphi 0, %s101
      %s102 = sphi 0, %s99
      %s103 = sphi 0, %s102
      %s119 = sphi 0, %s103
      %s125 = sphi 0, %s127
      %s128 = sphi 0, %s125
      %s129 = sphi 0, %s128
      %s145 = sphi 0, %s129
      %s151 = sphi 0, %s153
      %s154 = sphi 0, %s151
      %s155 = sphi 0, %s154
      %s171 = sphi 0, %s155
      %s177 = sphi 0, %s179
      %s180 = sphi 0, %s177
      %s181 = sphi 0, %s180
      %s197 = sphi 0, %s181
      %s203 = sphi 0, %s205
      %s206 = sphi 0, %s203
      %s207 = sphi 0, %s206
      %s223 = sphi 0, %s207
      %s229 = sphi 0, %s231
      %s232 = sphi 0, %s229
      %s233 = sphi 0, %s232
      %s249 = sphi 0, %s233
      %s255 = sphi 0, %s257
      %s258 = sphi 0, %s255
      %s259 = sphi 0, %s258
      %s275 = sphi 0, %s259
      %s281 = sphi 0, %s283
      %s284 = sphi 0, %s281
      %s285 = sphi 0, %s284
      %s301 = sphi 0, %s285
      %s307 = sphi 0, %s309
      %s310 = sphi 0, %s307
      %s311 = sphi 0, %s310
      %s327 = sphi 0, %s311
      %s333 = sphi 0, %s335
      %s336 = sphi 0, %s333
      %s337 = sphi 0, %s336
      %s353 = sphi 0, %s337
      %s359 = sphi 0, %s361
      %s362 = sphi 0, %s359
      %s363 = sphi 0, %s362
      %s379 = sphi 0, %s363
      %s385 = sphi 0, %s387
      %s388 = sphi 0, %s385
      %s389 = sphi 0, %s388
      %s405 = sphi 0, %s389
    $region4: #{tpu_custom_call.1} parent=1 // loop_header_branch
      %40 = sbr.rel (%p38) target = $region8
    $region5: #{tpu_custom_call.1} parent=1 // loop_body
      %s42 = ssub.s32 %s37, 1
      %s43 = ssub.s32 %s37, 2
      %s44 = sadd.s32 %s37, 1
      %s45 = ssub.s32 %s37, %s44
      %p46 = scmp.eq.s32.totalorder %s45, 0
      %s48 = sadd.s32 %s47, 1
      %s49 = scalar_select %p46, %s47, %s48
      %p52 = pneg %p46
      %p53 = scmp.eq.s32.totalorder %s37, 1
      %p54 = por %p52, %p53
      %p55 = scmp.ne.s32.totalorder %s47, %s50
      %p56 = scmp.eq.s32.totalorder %s37, 0
      %p57 = por %p55, %p56
      %p58 = scmp.ne.s32.totalorder %s47, %s50
      %p59 = scmp.eq.s32.totalorder %s42, 1
      %p60 = por %p58, %p59
      %p61 = scmp.ne.s32.totalorder %s50, %s51
      %p62 = scmp.eq.s32.totalorder %s42, 0
      %p63 = por %p61, %p62
      %p64 = scmp.ne.s32.totalorder %s50, %s51
      %p65 = scmp.eq.s32.totalorder %s43, 1
      %p66 = por %p64, %p65
      %p68 = scmp.ne.s32.totalorder %s51, %s67
      %p69 = scmp.eq.s32.totalorder %s43, 0
      %p70 = por %p68, %p69
      %s71 = ssub.s32 %s37, %s44
      %p72 = scmp.eq.s32.totalorder %s71, 0
      %s74 = sadd.s32 %s73, 1
      %s75 = scalar_select %p72, %s73, %s74
      %p78 = pneg %p72
      %p79 = scmp.eq.s32.totalorder %s37, 1
      %p80 = por %p78, %p79
      %p81 = scmp.ne.s32.totalorder %s73, %s76
      %p82 = scmp.eq.s32.totalorder %s37, 0
      %p83 = por %p81, %p82
      %p84 = scmp.ne.s32.totalorder %s73, %s76
      %p85 = scmp.eq.s32.totalorder %s42, 1
      %p86 = por %p84, %p85
      %p87 = scmp.ne.s32.totalorder %s76, %s77
      %p88 = scmp.eq.s32.totalorder %s42, 0
      %p89 = por %p87, %p88
      %p90 = scmp.ne.s32.totalorder %s76, %s77
      %p91 = scmp.eq.s32.totalorder %s43, 1
      %p92 = por %p90, %p91
      %p94 = scmp.ne.s32.totalorder %s77, %s93
      %p95 = scmp.eq.s32.totalorder %s43, 0
      %p96 = por %p94, %p95
      %s97 = ssub.s32 %s37, %s44
      %p98 = scmp.eq.s32.totalorder %s97, 0
      %s100 = sadd.s32 %s99, 1
      %s101 = scalar_select %p98, %s99, %s100
      %p104 = pneg %p98
      %p105 = scmp.eq.s32.totalorder %s37, 1
      %p106 = por %p104, %p105
      %p107 = scmp.ne.s32.totalorder %s99, %s102
      %p108 = scmp.eq.s32.totalorder %s37, 0
      %p109 = por %p107, %p108
      %p110 = scmp.ne.s32.totalorder %s99, %s102
      %p111 = scmp.eq.s32.totalorder %s42, 1
      %p112 = por %p110, %p111
      %p113 = scmp.ne.s32.totalorder %s102, %s103
      %p114 = scmp.eq.s32.totalorder %s42, 0
      %p115 = por %p113, %p114
      %p116 = scmp.ne.s32.totalorder %s102, %s103
      %p117 = scmp.eq.s32.totalorder %s43, 1
      %p118 = por %p116, %p117
      %p120 = scmp.ne.s32.totalorder %s103, %s119
      %p121 = scmp.eq.s32.totalorder %s43, 0
      %p122 = por %p120, %p121
      %s123 = ssub.s32 %s37, %s44
      %p124 = scmp.eq.s32.totalorder %s123, 0
      %s126 = sadd.s32 %s125, 1
      %s127 = scalar_select %p124, %s125, %s126
      %p130 = pneg %p124
      %p131 = scmp.eq.s32.totalorder %s37, 1
      %p132 = por %p130, %p131
      %p133 = scmp.ne.s32.totalorder %s125, %s128
      %p134 = scmp.eq.s32.totalorder %s37, 0
      %p135 = por %p133, %p134
      %p136 = scmp.ne.s32.totalorder %s125, %s128
      %p137 = scmp.eq.s32.totalorder %s42, 1
      %p138 = por %p136, %p137
      %p139 = scmp.ne.s32.totalorder %s128, %s129
      %p140 = scmp.eq.s32.totalorder %s42, 0
      %p141 = por %p139, %p140
      %p142 = scmp.ne.s32.totalorder %s128, %s129
      %p143 = scmp.eq.s32.totalorder %s43, 1
      %p144 = por %p142, %p143
      %p146 = scmp.ne.s32.totalorder %s129, %s145
      %p147 = scmp.eq.s32.totalorder %s43, 0
      %p148 = por %p146, %p147
      %s149 = ssub.s32 %s37, %s44
      %p150 = scmp.eq.s32.totalorder %s149, 0
      %s152 = sadd.s32 %s151, 1
      %s153 = scalar_select %p150, %s151, %s152
      %p156 = pneg %p150
      %p157 = scmp.eq.s32.totalorder %s37, 1
      %p158 = por %p156, %p157
      %p159 = scmp.ne.s32.totalorder %s151, %s154
      %p160 = scmp.eq.s32.totalorder %s37, 0
      %p161 = por %p159, %p160
      %p162 = scmp.ne.s32.totalorder %s151, %s154
      %p163 = scmp.eq.s32.totalorder %s42, 1
      %p164 = por %p162, %p163
      %p165 = scmp.ne.s32.totalorder %s154, %s155
      %p166 = scmp.eq.s32.totalorder %s42, 0
      %p167 = por %p165, %p166
      %p168 = scmp.ne.s32.totalorder %s154, %s155
      %p169 = scmp.eq.s32.totalorder %s43, 1
      %p170 = por %p168, %p169
      %p172 = scmp.ne.s32.totalorder %s155, %s171
      %p173 = scmp.eq.s32.totalorder %s43, 0
      %p174 = por %p172, %p173
      %s175 = ssub.s32 %s37, %s44
      %p176 = scmp.eq.s32.totalorder %s175, 0
      %s178 = sadd.s32 %s177, 1
      %s179 = scalar_select %p176, %s177, %s178
      %p182 = pneg %p176
      %p183 = scmp.eq.s32.totalorder %s37, 1
      %p184 = por %p182, %p183
      %p185 = scmp.ne.s32.totalorder %s177, %s180
      %p186 = scmp.eq.s32.totalorder %s37, 0
      %p187 = por %p185, %p186
      %p188 = scmp.ne.s32.totalorder %s177, %s180
      %p189 = scmp.eq.s32.totalorder %s42, 1
      %p190 = por %p188, %p189
      %p191 = scmp.ne.s32.totalorder %s180, %s181
      %p192 = scmp.eq.s32.totalorder %s42, 0
      %p193 = por %p191, %p192
      %p194 = scmp.ne.s32.totalorder %s180, %s181
      %p195 = scmp.eq.s32.totalorder %s43, 1
      %p196 = por %p194, %p195
      %p198 = scmp.ne.s32.totalorder %s181, %s197
      %p199 = scmp.eq.s32.totalorder %s43, 0
      %p200 = por %p198, %p199
      %s201 = ssub.s32 %s37, %s44
      %p202 = scmp.eq.s32.totalorder %s201, 0
      %s204 = sadd.s32 %s203, 1
      %s205 = scalar_select %p202, %s203, %s204
      %p208 = pneg %p202
      %p209 = scmp.eq.s32.totalorder %s37, 1
      %p210 = por %p208, %p209
      %p211 = scmp.ne.s32.totalorder %s203, %s206
      %p212 = scmp.eq.s32.totalorder %s37, 0
      %p213 = por %p211, %p212
      %p214 = scmp.ne.s32.totalorder %s203, %s206
      %p215 = scmp.eq.s32.totalorder %s42, 1
      %p216 = por %p214, %p215
      %p217 = scmp.ne.s32.totalorder %s206, %s207
      %p218 = scmp.eq.s32.totalorder %s42, 0
      %p219 = por %p217, %p218
      %p220 = scmp.ne.s32.totalorder %s206, %s207
      %p221 = scmp.eq.s32.totalorder %s43, 1
      %p222 = por %p220, %p221
      %p224 = scmp.ne.s32.totalorder %s207, %s223
      %p225 = scmp.eq.s32.totalorder %s43, 0
      %p226 = por %p224, %p225
      %s227 = ssub.s32 %s37, %s44
      %p228 = scmp.eq.s32.totalorder %s227, 0
      %s230 = sadd.s32 %s229, 1
      %s231 = scalar_select %p228, %s229, %s230
      %p234 = pneg %p228
      %p235 = scmp.eq.s32.totalorder %s37, 1
      %p236 = por %p234, %p235
      %p237 = scmp.ne.s32.totalorder %s229, %s232
      %p238 = scmp.eq.s32.totalorder %s37, 0
      %p239 = por %p237, %p238
      %p240 = scmp.ne.s32.totalorder %s229, %s232
      %p241 = scmp.eq.s32.totalorder %s42, 1
      %p242 = por %p240, %p241
      %p243 = scmp.ne.s32.totalorder %s232, %s233
      %p244 = scmp.eq.s32.totalorder %s42, 0
      %p245 = por %p243, %p244
      %p246 = scmp.ne.s32.totalorder %s232, %s233
      %p247 = scmp.eq.s32.totalorder %s43, 1
      %p248 = por %p246, %p247
      %p250 = scmp.ne.s32.totalorder %s233, %s249
      %p251 = scmp.eq.s32.totalorder %s43, 0
      %p252 = por %p250, %p251
      %s253 = ssub.s32 %s37, %s44
      %p254 = scmp.eq.s32.totalorder %s253, 0
      %s256 = sadd.s32 %s255, 1
      %s257 = scalar_select %p254, %s255, %s256
      %p260 = pneg %p254
      %p261 = scmp.eq.s32.totalorder %s37, 1
      %p262 = por %p260, %p261
      %p263 = scmp.ne.s32.totalorder %s255, %s258
      %p264 = scmp.eq.s32.totalorder %s37, 0
      %p265 = por %p263, %p264
      %p266 = scmp.ne.s32.totalorder %s255, %s258
      %p267 = scmp.eq.s32.totalorder %s42, 1
      %p268 = por %p266, %p267
      %p269 = scmp.ne.s32.totalorder %s258, %s259
      %p270 = scmp.eq.s32.totalorder %s42, 0
      %p271 = por %p269, %p270
      %p272 = scmp.ne.s32.totalorder %s258, %s259
      %p273 = scmp.eq.s32.totalorder %s43, 1
      %p274 = por %p272, %p273
      %p276 = scmp.ne.s32.totalorder %s259, %s275
      %p277 = scmp.eq.s32.totalorder %s43, 0
      %p278 = por %p276, %p277
      %s279 = ssub.s32 %s37, %s44
      %p280 = scmp.eq.s32.totalorder %s279, 0
      %s282 = sadd.s32 %s281, 1
      %s283 = scalar_select %p280, %s281, %s282
      %p286 = pneg %p280
      %p287 = scmp.eq.s32.totalorder %s37, 1
      %p288 = por %p286, %p287
      %p289 = scmp.ne.s32.totalorder %s281, %s284
      %p290 = scmp.eq.s32.totalorder %s37, 0
      %p291 = por %p289, %p290
      %p292 = scmp.ne.s32.totalorder %s281, %s284
      %p293 = scmp.eq.s32.totalorder %s42, 1
      %p294 = por %p292, %p293
      %p295 = scmp.ne.s32.totalorder %s284, %s285
      %p296 = scmp.eq.s32.totalorder %s42, 0
      %p297 = por %p295, %p296
      %p298 = scmp.ne.s32.totalorder %s284, %s285
      %p299 = scmp.eq.s32.totalorder %s43, 1
      %p300 = por %p298, %p299
      %p302 = scmp.ne.s32.totalorder %s285, %s301
      %p303 = scmp.eq.s32.totalorder %s43, 0
      %p304 = por %p302, %p303
      %s305 = ssub.s32 %s37, %s44
      %p306 = scmp.eq.s32.totalorder %s305, 0
      %s308 = sadd.s32 %s307, 1
      %s309 = scalar_select %p306, %s307, %s308
      %p312 = pneg %p306
      %p313 = scmp.eq.s32.totalorder %s37, 1
      %p314 = por %p312, %p313
      %p315 = scmp.ne.s32.totalorder %s307, %s310
      %p316 = scmp.eq.s32.totalorder %s37, 0
      %p317 = por %p315, %p316
      %p318 = scmp.ne.s32.totalorder %s307, %s310
      %p319 = scmp.eq.s32.totalorder %s42, 1
      %p320 = por %p318, %p319
      %p321 = scmp.ne.s32.totalorder %s310, %s311
      %p322 = scmp.eq.s32.totalorder %s42, 0
      %p323 = por %p321, %p322
      %p324 = scmp.ne.s32.totalorder %s310, %s311
      %p325 = scmp.eq.s32.totalorder %s43, 1
      %p326 = por %p324, %p325
      %p328 = scmp.ne.s32.totalorder %s311, %s327
      %p329 = scmp.eq.s32.totalorder %s43, 0
      %p330 = por %p328, %p329
      %s331 = ssub.s32 %s37, %s44
      %p332 = scmp.eq.s32.totalorder %s331, 0
      %s334 = sadd.s32 %s333, 1
      %s335 = scalar_select %p332, %s333, %s334
      %p338 = pneg %p332
      %p339 = scmp.eq.s32.totalorder %s37, 1
      %p340 = por %p338, %p339
      %p341 = scmp.ne.s32.totalorder %s333, %s336
      %p342 = scmp.eq.s32.totalorder %s37, 0
      %p343 = por %p341, %p342
      %p344 = scmp.ne.s32.totalorder %s333, %s336
      %p345 = scmp.eq.s32.totalorder %s42, 1
      %p346 = por %p344, %p345
      %p347 = scmp.ne.s32.totalorder %s336, %s337
      %p348 = scmp.eq.s32.totalorder %s42, 0
      %p349 = por %p347, %p348
      %p350 = scmp.ne.s32.totalorder %s336, %s337
      %p351 = scmp.eq.s32.totalorder %s43, 1
      %p352 = por %p350, %p351
      %p354 = scmp.ne.s32.totalorder %s337, %s353
      %p355 = scmp.eq.s32.totalorder %s43, 0
      %p356 = por %p354, %p355
      %s357 = ssub.s32 %s37, %s44
      %p358 = scmp.eq.s32.totalorder %s357, 0
      %s360 = sadd.s32 %s359, 1
      %s361 = scalar_select %p358, %s359, %s360
      %p364 = pneg %p358
      %p365 = scmp.eq.s32.totalorder %s37, 1
      %p366 = por %p364, %p365
      %p367 = scmp.ne.s32.totalorder %s359, %s362
      %p368 = scmp.eq.s32.totalorder %s37, 0
      %p369 = por %p367, %p368
      %p370 = scmp.ne.s32.totalorder %s359, %s362
      %p371 = scmp.eq.s32.totalorder %s42, 1
      %p372 = por %p370, %p371
      %p373 = scmp.ne.s32.totalorder %s362, %s363
      %p374 = scmp.eq.s32.totalorder %s42, 0
      %p375 = por %p373, %p374
      %p376 = scmp.ne.s32.totalorder %s362, %s363
      %p377 = scmp.eq.s32.totalorder %s43, 1
      %p378 = por %p376, %p377
      %p380 = scmp.ne.s32.totalorder %s363, %s379
      %p381 = scmp.eq.s32.totalorder %s43, 0
      %p382 = por %p380, %p381
      %s383 = ssub.s32 %s37, %s44
      %p384 = scmp.eq.s32.totalorder %s383, 0
      %s386 = sadd.s32 %s385, 1
      %s387 = scalar_select %p384, %s385, %s386
      %p390 = pneg %p384
      %p391 = scmp.eq.s32.totalorder %s37, 1
      %p392 = por %p390, %p391
      %p393 = scmp.ne.s32.totalorder %s385, %s388
      %p394 = scmp.eq.s32.totalorder %s37, 0
      %p395 = por %p393, %p394
      %p396 = scmp.ne.s32.totalorder %s385, %s388
      %p397 = scmp.eq.s32.totalorder %s42, 1
      %p398 = por %p396, %p397
      %p399 = scmp.ne.s32.totalorder %s388, %s389
      %p400 = scmp.eq.s32.totalorder %s42, 0
      %p401 = por %p399, %p400
      %p402 = scmp.ne.s32.totalorder %s388, %s389
      %p403 = scmp.eq.s32.totalorder %s43, 1
      %p404 = por %p402, %p403
      %p406 = scmp.ne.s32.totalorder %s389, %s405
      %p407 = scmp.eq.s32.totalorder %s43, 0
      %p408 = por %p406, %p407
      %p409 = scmp.le.s32.totalorder 1, %s37
      %p410 = scmp.lt.s32.totalorder %s37, 3
      %p411 = pnand %p409, %p410
      %p412 = pneg %p411
      // Predicated region
      $region9: #{tpu_custom_call.1} parent=5 // pred_check
        _
      $region10: #{tpu_custom_call.1} parent=5 // pred_check_branch
        %414 = sbr.rel (%p411) target = $region12
      $region11: #{tpu_custom_call.1} parent=5 // pred_region
        %s415 = ssub.s32 %s37, 1
      $region12: #{tpu_custom_call.1} parent=5 // pred_fallthru
        _
      %p416 = scmp.lt.s32.totalorder %s37, 2
      // Predicated region
      $region13: #{tpu_custom_call.1} parent=5 // pred_check
        %p417 = pneg %p416
      $region14: #{tpu_custom_call.1} parent=5 // pred_check_branch
        %419 = sbr.rel (%p417) target = $region16
      $region15: #{tpu_custom_call.1} parent=5 // pred_region
        // Predicated region
        $region17: #{tpu_custom_call.1} parent=15 // pred_check
          %p420 = pneg %p57
        $region18: #{tpu_custom_call.1} parent=15 // pred_check_branch
          %422 = sbr.rel (%p420) target = $region20
        $region19: #{tpu_custom_call.1} parent=15 // pred_region
          %s423 = sand.u32 %s47, 1
          %s424 = scalar_lea.sflag [#allocation4], %s423
          %s425 = sand.u32 %s47, 1
          %s426 = smul.addr %s425, 8
          %s427 = scalar_lea.vmem [#allocation3], %s426
          %s429 = ssub.s32 128, 128
          %430 = vsyncadd %s424, %s429
          %s431 = smul.addr %s37, 2
          %s432 = smul.addr %s431, 64
          %s433 = scalar_lea.hbm %s0, %s432
          %s434 = sshll.u32 %s427, 4
          %s435 = int_to_ptr.vmem [resolvable:$true] %s434
          %440 = dma.hbm_to_vmem [thread:$0]  %s433, 128, %s435, %s424, 64, 64, 4
        $region20: #{tpu_custom_call.1} parent=15 // pred_fallthru
          _
        // Predicated region
        $region21: #{tpu_custom_call.1} parent=15 // pred_check
          %p441 = pneg %p83
        $region22: #{tpu_custom_call.1} parent=15 // pred_check_branch
          %443 = sbr.rel (%p441) target = $region24
        $region23: #{tpu_custom_call.1} parent=15 // pred_region
          %s444 = sand.u32 %s37, 1
          %s445 = scalar_lea.sflag [#allocation7], %s444
          %s446 = sand.u32 %s73, 1
          %s447 = smul.addr %s446, 8
          %s448 = scalar_lea.vmem [#allocation6], %s447
          %s450 = ssub.s32 128, 128
          %451 = vsyncadd %s445, %s450
          %s452 = smul.addr %s37, 2
          %s453 = smul.addr %s452, 64
          %s454 = scalar_lea.hbm %s1, %s453
          %s455 = sshll.u32 %s448, 4
          %s456 = int_to_ptr.vmem [resolvable:$true] %s455
          %461 = dma.hbm_to_vmem [thread:$0]  %s454, 128, %s456, %s445, 64, 64, 4
        $region24: #{tpu_custom_call.1} parent=15 // pred_fallthru
          _
        // Predicated region
        $region25: #{tpu_custom_call.1} parent=15 // pred_check
          %p462 = pneg %p109
        $region26: #{tpu_custom_call.1} parent=15 // pred_check_branch
          %464 = sbr.rel (%p462) target = $region28
        $region27: #{tpu_custom_call.1} parent=15 // pred_region
          %s465 = sand.u32 %s37, 1
          %s466 = scalar_lea.sflag [#allocation7], %s465
          %s467 = sand.u32 %s99, 1
          %s468 = smul.addr %s467, 8
          %s469 = scalar_lea.vmem [#allocation8], %s468
          %s471 = ssub.s32 128, 128
          %472 = vsyncadd %s466, %s471
          %s473 = smul.addr %s37, 2
          %s474 = smul.addr %s473, 64
          %s475 = scalar_lea.hbm %s2, %s474
          %s476 = sshll.u32 %s469, 4
          %s477 = int_to_ptr.vmem [resolvable:$true] %s476
          %482 = dma.hbm_to_vmem [thread:$0]  %s475, 128, %s477, %s466, 64, 64, 4
        $region28: #{tpu_custom_call.1} parent=15 // pred_fallthru
          _
        // Predicated region
        $region29: #{tpu_custom_call.1} parent=15 // pred_check
          %p483 = pneg %p135
        $region30: #{tpu_custom_call.1} parent=15 // pred_check_branch
          %485 = sbr.rel (%p483) target = $region32
        $region31: #{tpu_custom_call.1} parent=15 // pred_region
          %s486 = sand.u32 %s37, 1
          %s487 = scalar_lea.sflag [#allocation10], %s486
          %s488 = sand.u32 %s125, 1
          %s489 = smul.addr %s488, 64
          %s490 = scalar_lea.vmem [#allocation9], %s489
          %s492 = ssub.s32 1024, 1024
          %493 = vsyncadd %s487, %s492
          %s494 = smul.addr %s37, 16
          %s495 = smul.addr %s494, 64
          %s496 = scalar_lea.hbm %s3, %s495
          %s497 = sshll.u32 %s490, 4
          %s498 = int_to_ptr.vmem [resolvable:$true] %s497
          %503 = dma.hbm_to_vmem [thread:$0]  %s496, 1024, %s498, %s487, 64, 64, 4
        $region32: #{tpu_custom_call.1} parent=15 // pred_fallthru
          _
        // Predicated region
        $region33: #{tpu_custom_call.1} parent=15 // pred_check
          %p504 = pneg %p161
        $region34: #{tpu_custom_call.1} parent=15 // pred_check_branch
          %506 = sbr.rel (%p504) target = $region36
        $region35: #{tpu_custom_call.1} parent=15 // pred_region
          %p507 = scmp.lt.s32.totalorder %s37, 1
          %s508 = scalar_select %p507, %s37, 1
          %s509 = scalar_lea.vmem %s4, %s508
        $region36: #{tpu_custom_call.1} parent=15 // pred_fallthru
          _
        // Predicated region
        $region37: #{tpu_custom_call.1} parent=15 // pred_check
          %p510 = pneg %p187
        $region38: #{tpu_custom_call.1} parent=15 // pred_check_branch
          %512 = sbr.rel (%p510) target = $region40
        $region39: #{tpu_custom_call.1} parent=15 // pred_region
          %s513 = sand.u32 %s37, 1
          %s514 = scalar_lea.sflag [#allocation10], %s513
          %s515 = sand.u32 %s177, 1
          %s516 = smul.addr %s515, 128
          %s517 = scalar_lea.vmem [#allocation11], %s516
          %s519 = ssub.s32 2048, 2048
          %520 = vsyncadd %s514, %s519
          %s521 = smul.addr %s37, 32
          %s522 = smul.addr %s521, 64
          %s523 = scalar_lea.hbm %s5, %s522
          %s524 = sshll.u32 %s517, 4
          %s525 = int_to_ptr.vmem [resolvable:$true] %s524
          %530 = dma.hbm_to_vmem [thread:$0]  %s523, 2048, %s525, %s514, 64, 64, 4
        $region40: #{tpu_custom_call.1} parent=15 // pred_fallthru
          _
        // Predicated region
        $region41: #{tpu_custom_call.1} parent=15 // pred_check
          %p531 = pneg %p213
        $region42: #{tpu_custom_call.1} parent=15 // pred_check_branch
          %533 = sbr.rel (%p531) target = $region44
        $region43: #{tpu_custom_call.1} parent=15 // pred_region
          %p534 = scmp.lt.s32.totalorder %s37, 1
          %s535 = scalar_select %p534, %s37, 1
          %s536 = smul.addr %s535, 2
          %s537 = scalar_lea.vmem %s6, %s536
        $region44: #{tpu_custom_call.1} parent=15 // pred_fallthru
          _
        // Predicated region
        $region45: #{tpu_custom_call.1} parent=15 // pred_check
          %p538 = pneg %p239
        $region46: #{tpu_custom_call.1} parent=15 // pred_check_branch
          %540 = sbr.rel (%p538) target = $region48
        $region47: #{tpu_custom_call.1} parent=15 // pred_region
          %s541 = sand.u32 %s37, 1
          %s542 = scalar_lea.sflag [#allocation13], %s541
          %s543 = sand.u32 %s229, 1
          %s544 = smul.addr %s543, 128
          %s545 = scalar_lea.vmem [#allocation12], %s544
          %s547 = ssub.s32 2048, 2048
          %548 = vsyncadd %s542, %s547
          %s549 = smul.addr %s37, 32
          %s550 = smul.addr %s549, 64
          %s551 = scalar_lea.hbm %s7, %s550
          %s552 = sshll.u32 %s545, 4
          %s553 = int_to_ptr.vmem [resolvable:$true] %s552
          %558 = dma.hbm_to_vmem [thread:$0]  %s551, 2048, %s553, %s542, 64, 64, 4
        $region48: #{tpu_custom_call.1} parent=15 // pred_fallthru
          _
        // Predicated region
        $region49: #{tpu_custom_call.1} parent=15 // pred_check
          %p559 = pneg %p265
        $region50: #{tpu_custom_call.1} parent=15 // pred_check_branch
          %561 = sbr.rel (%p559) target = $region52
        $region51: #{tpu_custom_call.1} parent=15 // pred_region
          %p562 = scmp.lt.s32.totalorder %s37, 1
          %s563 = scalar_select %p562, %s37, 1
          %s564 = smul.addr %s563, 2
          %s565 = scalar_lea.vmem %s8, %s564
        $region52: #{tpu_custom_call.1} parent=15 // pred_fallthru
          _
        // Predicated region
        $region53: #{tpu_custom_call.1} parent=15 // pred_check
          %p566 = pneg %p291
        $region54: #{tpu_custom_call.1} parent=15 // pred_check_branch
          %568 = sbr.rel (%p566) target = $region56
        $region55: #{tpu_custom_call.1} parent=15 // pred_region
          %s569 = sand.u32 %s37, 1
          %s570 = scalar_lea.sflag [#allocation13], %s569
          %s571 = sand.u32 %s281, 1
          %s572 = smul.addr %s571, 192
          %s573 = scalar_lea.vmem [#allocation14], %s572
          %s575 = ssub.s32 3072, 3072
          %576 = vsyncadd %s570, %s575
          %s577 = smul.addr %s37, 48
          %s578 = smul.addr %s577, 64
          %s579 = scalar_lea.hbm %s9, %s578
          %s580 = sshll.u32 %s573, 4
          %s581 = int_to_ptr.vmem [resolvable:$true] %s580
          %586 = dma.hbm_to_vmem [thread:$0]  %s579, 3072, %s581, %s570, 64, 64, 4
        $region56: #{tpu_custom_call.1} parent=15 // pred_fallthru
          _
        // Predicated region
        $region57: #{tpu_custom_call.1} parent=15 // pred_check
          %p587 = pneg %p317
        $region58: #{tpu_custom_call.1} parent=15 // pred_check_branch
          %589 = sbr.rel (%p587) target = $region60
        $region59: #{tpu_custom_call.1} parent=15 // pred_region
          %p590 = scmp.lt.s32.totalorder %s37, 1
          %s591 = scalar_select %p590, %s37, 1
          %s592 = scalar_lea.vmem %s10, %s591
        $region60: #{tpu_custom_call.1} parent=15 // pred_fallthru
          _
        // Predicated region
        $region61: #{tpu_custom_call.1} parent=15 // pred_check
          %p593 = pneg %p343
        $region62: #{tpu_custom_call.1} parent=15 // pred_check_branch
          %595 = sbr.rel (%p593) target = $region64
        $region63: #{tpu_custom_call.1} parent=15 // pred_region
          %s596 = sand.u32 %s333, 1
          %s597 = scalar_lea.sflag [#allocation16], %s596
          %s598 = sand.u32 %s333, 1
          %s599 = smul.addr %s598, 64
          %s600 = scalar_lea.vmem [#allocation15], %s599
          %s602 = ssub.s32 1024, 1024
          %603 = vsyncadd %s597, %s602
          %s604 = smul.addr %s37, 16
          %s605 = smul.addr %s604, 64
          %s606 = scalar_lea.hbm %s11, %s605
          %s607 = sshll.u32 %s600, 4
          %s608 = int_to_ptr.vmem [resolvable:$true] %s607
          %613 = dma.hbm_to_vmem [thread:$0]  %s606, 1024, %s608, %s597, 64, 64, 4
        $region64: #{tpu_custom_call.1} parent=15 // pred_fallthru
          _
        // Predicated region
        $region65: #{tpu_custom_call.1} parent=15 // pred_check
          %p614 = pneg %p369
        $region66: #{tpu_custom_call.1} parent=15 // pred_check_branch
          %616 = sbr.rel (%p614) target = $region68
        $region67: #{tpu_custom_call.1} parent=15 // pred_region
          %p617 = scmp.lt.s32.totalorder %s37, 1
          %s618 = scalar_select %p617, %s37, 1
          %s619 = scalar_lea.vmem %s12, %s618
        $region68: #{tpu_custom_call.1} parent=15 // pred_fallthru
          _
      $region16: #{tpu_custom_call.1} parent=5 // pred_fallthru
        _
      %p620 = scmp.le.s32.totalorder 1, %s37
      %p621 = scmp.lt.s32.totalorder %s37, 3
      %p622 = pnand %p620, %p621
      %p623 = pneg %p622
      // Predicated region
      $region69: #{tpu_custom_call.1} parent=5 // pred_check
        _
      $region70: #{tpu_custom_call.1} parent=5 // pred_check_branch
        %625 = sbr.rel (%p622) target = $region72
      $region71: #{tpu_custom_call.1} parent=5 // pred_region
        %s626 = ssub.s32 %s37, 1
        %s627 = sand.u32 %s50, 1
        %s628 = scalar_lea.sflag [#allocation4], %s627
        %s629 = sand.u32 %s50, 1
        %s630 = smul.addr %s629, 8
        %s631 = scalar_lea.vmem [#allocation3], %s630
        // Predicated region
        $region73: #{tpu_custom_call.1} parent=71 // pred_check
          %p632 = pneg %p63
        $region74: #{tpu_custom_call.1} parent=71 // pred_check_branch
          %634 = sbr.rel (%p632) target = $region76
        $region75: #{tpu_custom_call.1} parent=71 // pred_region
          %635 = dma.done %s628, 128
        $region76: #{tpu_custom_call.1} parent=71 // pred_fallthru
          _
        %s636 = sand.u32 %s42, 1
        %s637 = scalar_lea.sflag [#allocation7], %s636
        %s638 = sand.u32 %s76, 1
        %s639 = smul.addr %s638, 8
        %s640 = scalar_lea.vmem [#allocation6], %s639
        // Predicated region
        $region77: #{tpu_custom_call.1} parent=71 // pred_check
          %p641 = pneg %p89
        $region78: #{tpu_custom_call.1} parent=71 // pred_check_branch
          %643 = sbr.rel (%p641) target = $region80
        $region79: #{tpu_custom_call.1} parent=71 // pred_region
          %644 = dma.done %s637, 128
        $region80: #{tpu_custom_call.1} parent=71 // pred_fallthru
          _
        %s645 = sand.u32 %s42, 1
        %s646 = scalar_lea.sflag [#allocation7], %s645
        %s647 = sand.u32 %s102, 1
        %s648 = smul.addr %s647, 8
        %s649 = scalar_lea.vmem [#allocation8], %s648
        // Predicated region
        $region81: #{tpu_custom_call.1} parent=71 // pred_check
          %p650 = pneg %p115
        $region82: #{tpu_custom_call.1} parent=71 // pred_check_branch
          %652 = sbr.rel (%p650) target = $region84
        $region83: #{tpu_custom_call.1} parent=71 // pred_region
          %653 = dma.done %s646, 128
        $region84: #{tpu_custom_call.1} parent=71 // pred_fallthru
          _
        %s654 = sand.u32 %s42, 1
        %s655 = scalar_lea.sflag [#allocation10], %s654
        %s656 = sand.u32 %s128, 1
        %s657 = smul.addr %s656, 64
        %s658 = scalar_lea.vmem [#allocation9], %s657
        // Predicated region
        $region85: #{tpu_custom_call.1} parent=71 // pred_check
          %p659 = pneg %p141
        $region86: #{tpu_custom_call.1} parent=71 // pred_check_branch
          %661 = sbr.rel (%p659) target = $region88
        $region87: #{tpu_custom_call.1} parent=71 // pred_region
          %662 = dma.done %s655, 1024
        $region88: #{tpu_custom_call.1} parent=71 // pred_fallthru
          _
        %s663 = sand.u32 %s42, 1
        %s664 = scalar_lea.sflag [#allocation10], %s663
        %s665 = sand.u32 %s180, 1
        %s666 = smul.addr %s665, 128
        %s667 = scalar_lea.vmem [#allocation11], %s666
        // Predicated region
        $region89: #{tpu_custom_call.1} parent=71 // pred_check
          %p668 = pneg %p193
        $region90: #{tpu_custom_call.1} parent=71 // pred_check_branch
          %670 = sbr.rel (%p668) target = $region92
        $region91: #{tpu_custom_call.1} parent=71 // pred_region
          %671 = dma.done %s664, 2048
        $region92: #{tpu_custom_call.1} parent=71 // pred_fallthru
          _
        %s672 = sand.u32 %s42, 1
        %s673 = scalar_lea.sflag [#allocation13], %s672
        %s674 = sand.u32 %s232, 1
        %s675 = smul.addr %s674, 128
        %s676 = scalar_lea.vmem [#allocation12], %s675
        // Predicated region
        $region93: #{tpu_custom_call.1} parent=71 // pred_check
          %p677 = pneg %p245
        $region94: #{tpu_custom_call.1} parent=71 // pred_check_branch
          %679 = sbr.rel (%p677) target = $region96
        $region95: #{tpu_custom_call.1} parent=71 // pred_region
          %680 = dma.done %s673, 2048
        $region96: #{tpu_custom_call.1} parent=71 // pred_fallthru
          _
        %s681 = sand.u32 %s42, 1
        %s682 = scalar_lea.sflag [#allocation13], %s681
        %s683 = sand.u32 %s284, 1
        %s684 = smul.addr %s683, 192
        %s685 = scalar_lea.vmem [#allocation14], %s684
        // Predicated region
        $region97: #{tpu_custom_call.1} parent=71 // pred_check
          %p686 = pneg %p297
        $region98: #{tpu_custom_call.1} parent=71 // pred_check_branch
          %688 = sbr.rel (%p686) target = $region100
        $region99: #{tpu_custom_call.1} parent=71 // pred_region
          %689 = dma.done %s682, 3072
        $region100: #{tpu_custom_call.1} parent=71 // pred_fallthru
          _
        %s690 = sand.u32 %s336, 1
        %s691 = scalar_lea.sflag [#allocation16], %s690
        %s692 = sand.u32 %s336, 1
        %s693 = smul.addr %s692, 64
        %s694 = scalar_lea.vmem [#allocation15], %s693
        // Predicated region
        $region101: #{tpu_custom_call.1} parent=71 // pred_check
          %p695 = pneg %p349
        $region102: #{tpu_custom_call.1} parent=71 // pred_check_branch
          %697 = sbr.rel (%p695) target = $region104
        $region103: #{tpu_custom_call.1} parent=71 // pred_region
          %698 = dma.done %s691, 1024
        $region104: #{tpu_custom_call.1} parent=71 // pred_fallthru
          _
        %s699 = sand.u32 %s50, 1
        %s700 = scalar_lea.sflag [#allocation4], %s699
        %s701 = sand.u32 %s50, 1
        %s702 = smul.addr %s701, 8
        %s703 = scalar_lea.vmem [#allocation3], %s702
        %p704 = pneg %p63
        %p705 = pneg %p60
        %s706 = sand.u32 %s42, 1
        %s707 = scalar_lea.sflag [#allocation7], %s706
        %s708 = sand.u32 %s76, 1
        %s709 = smul.addr %s708, 8
        %s710 = scalar_lea.vmem [#allocation6], %s709
        %p711 = pneg %p89
        %p712 = pneg %p86
        %s713 = sand.u32 %s42, 1
        %s714 = scalar_lea.sflag [#allocation7], %s713
        %s715 = sand.u32 %s102, 1
        %s716 = smul.addr %s715, 8
        %s717 = scalar_lea.vmem [#allocation8], %s716
        %p718 = pneg %p115
        %p719 = pneg %p112
        %s720 = sand.u32 %s42, 1
        %s721 = scalar_lea.sflag [#allocation10], %s720
        %s722 = sand.u32 %s128, 1
        %s723 = smul.addr %s722, 64
        %s724 = scalar_lea.vmem [#allocation9], %s723
        %p725 = pneg %p141
        %p726 = pneg %p138
        %p727 = scmp.lt.s32.totalorder %s42, 1
        %s728 = scalar_select %p727, %s42, 1
        %s729 = scalar_lea.vmem %s4, %s728
        %p730 = pneg %p167
        %p731 = pneg %p164
        %s732 = sand.u32 %s42, 1
        %s733 = scalar_lea.sflag [#allocation10], %s732
        %s734 = sand.u32 %s180, 1
        %s735 = smul.addr %s734, 128
        %s736 = scalar_lea.vmem [#allocation11], %s735
        %p737 = pneg %p193
        %p738 = pneg %p190
        %p739 = scmp.lt.s32.totalorder %s42, 1
        %s740 = scalar_select %p739, %s42, 1
        %s741 = smul.addr %s740, 2
        %s742 = scalar_lea.vmem %s6, %s741
        %p743 = pneg %p219
        %p744 = pneg %p216
        %s745 = sand.u32 %s42, 1
        %s746 = scalar_lea.sflag [#allocation13], %s745
        %s747 = sand.u32 %s232, 1
        %s748 = smul.addr %s747, 128
        %s749 = scalar_lea.vmem [#allocation12], %s748
        %p750 = pneg %p245
        %p751 = pneg %p242
        %p752 = scmp.lt.s32.totalorder %s42, 1
        %s753 = scalar_select %p752, %s42, 1
        %s754 = smul.addr %s753, 2
        %s755 = scalar_lea.vmem %s8, %s754
        %p756 = pneg %p271
        %p757 = pneg %p268
        %s758 = sand.u32 %s42, 1
        %s759 = scalar_lea.sflag [#allocation13], %s758
        %s760 = sand.u32 %s284, 1
        %s761 = smul.addr %s760, 192
        %s762 = scalar_lea.vmem [#allocation14], %s761
        %p763 = pneg %p297
        %p764 = pneg %p294
        %p765 = scmp.lt.s32.totalorder %s42, 1
        %s766 = scalar_select %p765, %s42, 1
        %s767 = scalar_lea.vmem %s10, %s766
        %p768 = pneg %p323
        %p769 = pneg %p320
        %s770 = sand.u32 %s336, 1
        %s771 = scalar_lea.sflag [#allocation16], %s770
        %s772 = sand.u32 %s336, 1
        %s773 = smul.addr %s772, 64
        %s774 = scalar_lea.vmem [#allocation15], %s773
        %p775 = pneg %p349
        %p776 = pneg %p346
        %p777 = scmp.lt.s32.totalorder %s42, 1
        %s778 = scalar_select %p777, %s42, 1
        %s779 = scalar_lea.vmem %s12, %s778
        %p780 = pneg %p375
        %p781 = pneg %p372
        %p782 = pneg %p401
        %p783 = pneg %p398
        %s784 = sand.u32 %s388, 1
        %s785 = scalar_lea.sflag [#allocation5], %s784
        %s786 = sand.u32 %s388, 1
        %s787 = smul.addr %s786, 16
        %s788 = scalar_lea.vmem [#allocation17], %s787
        %p789 = scmp.lt.s32.totalorder %s42, 1
        %s790 = scalar_select %p789, %s42, 1
        %s791 = scalar_lea.vmem %s4, %s790
        %p792 = scmp.lt.s32.totalorder %s42, 1
        %s793 = scalar_select %p792, %s42, 1
        %s794 = smul.addr %s793, 2
        %s795 = scalar_lea.vmem %s6, %s794
        %p796 = scmp.lt.s32.totalorder %s42, 1
        %s797 = scalar_select %p796, %s42, 1
        %s798 = smul.addr %s797, 2
        %s799 = scalar_lea.vmem %s8, %s798
        %p800 = scmp.lt.s32.totalorder %s42, 1
        %s801 = scalar_select %p800, %s42, 1
        %s802 = scalar_lea.vmem %s10, %s801
        %p803 = scmp.lt.s32.totalorder %s42, 1
        %s804 = scalar_select %p803, %s42, 1
        %s805 = scalar_lea.vmem %s12, %s804
        %v807 = vld [vmem:[%s640] sm:$0xf]
        %v808 = vld [vmem:[%s640 + $0x4] sm:$0xf]
        %v809 = vld [vmem:[%s649] sm:$0xf]
        %v810 = vld [vmem:[%s649 + $0x4] sm:$0xf]
        %v811 = vld [vmem:[%s631] sm:$0xf]
        %v812 = vld [vmem:[%s631 + $0x4] sm:$0xf]
        %v813 = vld [vmem:[%s658] sm:$0xf]
        %v814 = vld [vmem:[%s658 + $0x4] sm:$0xf]
        %v815 = vld [vmem:[%s658 + $0x8] sm:$0xf]
        %v816 = vld [vmem:[%s658 + $0xc] sm:$0xf]
        %v817 = vld [vmem:[%s658 + $0x10] sm:$0xf]
        %v818 = vld [vmem:[%s658 + $0x14] sm:$0xf]
        %v819 = vld [vmem:[%s658 + $0x18] sm:$0xf]
        %v820 = vld [vmem:[%s658 + $0x1c] sm:$0xf]
        %v821 = vld [vmem:[%s658 + $0x20] sm:$0xf]
        %v822 = vld [vmem:[%s658 + $0x24] sm:$0xf]
        %v823 = vld [vmem:[%s658 + $0x28] sm:$0xf]
        %v824 = vld [vmem:[%s658 + $0x2c] sm:$0xf]
        %v825 = vld [vmem:[%s658 + $0x30] sm:$0xf]
        %v826 = vld [vmem:[%s658 + $0x34] sm:$0xf]
        %v827 = vld [vmem:[%s658 + $0x38] sm:$0xf]
        %v828 = vld [vmem:[%s658 + $0x3c] sm:$0xf]
        %v829 = vld [vmem:[%s791] sm:$0x1]
        %v831 = vlaneseq
        %v832 = vshrl.u32 %v831, 7
        %v833 = vsub.s32 0, %v832
        %v834 = vrot.slane %v829, %v833
        %v838 = vunpack.c.l.b16 %v811
        %v839 = vunpack.c.l.b16 %v812
        %v840 = vpack.c.b16 %v839, %v838
        %v858 = vunpack.c.l.b16 %v813
        %v859 = vunpack.c.l.b16 %v814
        %v860 = vunpack.c.l.b16 %v815
        %v861 = vunpack.c.l.b16 %v816
        %v862 = vunpack.c.l.b16 %v817
        %v863 = vunpack.c.l.b16 %v818
        %v864 = vunpack.c.l.b16 %v819
        %v865 = vunpack.c.l.b16 %v820
        %v866 = vunpack.c.l.b16 %v821
        %v867 = vunpack.c.l.b16 %v822
        %v868 = vunpack.c.l.b16 %v823
        %v869 = vunpack.c.l.b16 %v824
        %v870 = vunpack.c.l.b16 %v825
        %v871 = vunpack.c.l.b16 %v826
        %v872 = vunpack.c.l.b16 %v827
        %v873 = vunpack.c.l.b16 %v828
        %v874 = vpack.c.b16 %v859, %v858
        %v875 = vpack.c.b16 %v861, %v860
        %v876 = vpack.c.b16 %v863, %v862
        %v877 = vpack.c.b16 %v865, %v864
        %v878 = vpack.c.b16 %v867, %v866
        %v879 = vpack.c.b16 %v869, %v868
        %v880 = vpack.c.b16 %v871, %v870
        %v881 = vpack.c.b16 %v873, %v872
        %890 = vmatprep.subr.bf16.mxu0 0
        %891 = vmatpush1.bf16.msra.mxu0 %v874
        %892 = vmatprep.subr.bf16.mxu0 0
        %893 = vmatpush1.bf16.msra.mxu0 %v875
        %894 = vmatprep.subr.bf16.mxu0 0
        %895 = vmatpush1.bf16.msra.mxu0 %v876
        %896 = vmatprep.subr.bf16.mxu0 0
        %897 = vmatpush1.bf16.msra.mxu0 %v877
        %898 = vmatprep.subr.bf16.mxu0 0
        %899 = vmatpush1.bf16.msra.mxu0 %v878
        %900 = vmatprep.subr.bf16.mxu0 0
        %901 = vmatpush1.bf16.msra.mxu0 %v879
        %902 = vmatprep.subr.bf16.mxu0 0
        %903 = vmatpush1.bf16.msra.mxu0 %v880
        %904 = vmatprep.subr.bf16.mxu0 0
        %905 = vmatpush1.bf16.msra.mxu0 %v881
        %906 = vmatprep.subr.bf16.mxu0 0
        %907 = vmatpush1.bf16.msra.mxu0 0
        %908 = vmatprep.subr.bf16.mxu0 0
        %909 = vmatpush1.bf16.msra.mxu0 0
        %910 = vmatprep.subr.bf16.mxu0 0
        %911 = vmatpush1.bf16.msra.mxu0 0
        %912 = vmatprep.subr.bf16.mxu0 0
        %913 = vmatpush1.bf16.msra.mxu0 0
        %914 = vmatprep.subr.bf16.mxu0 0
        %915 = vmatpush1.bf16.msra.mxu0 0
        %916 = vmatprep.subr.bf16.mxu0 0
        %917 = vmatpush1.bf16.msra.mxu0 0
        %918 = vmatprep.subr.bf16.mxu0 0
        %919 = vmatpush1.bf16.msra.mxu0 0
        %920 = vmatprep.subr.bf16.mxu0 0
        %921 = vmatpush1.bf16.msra.mxu0 0
        %922 = vmatprep.mubr.bf16.mxu0 0
        %923 = vmatmul.mubr.bf16.gmra.mrb[0].mxu0 %v840
        %v924 = vpop.f32.mrb[0].mxu0
        %v925 = vadd.f32 %v834, %v924
        %v926 = vpop.f32.mrb[0].mxu0
        %v927 = vpop.f32.mrb[0].mxu0
        %v928 = vadd.f32 %v834, %v927
        %v929 = vpop.f32.mrb[0].mxu0
        %930 = vdwg.mxu0
        %v931 = vpack.c.bf16 %v928, %v925
        %v934 = vunpack.c.l.b16 %v809
        %v935 = vunpack.c.l.b16 %v810
        %v936 = vpack.c.b16 %v935, %v934
        %vm937 = vcmask 130048
        %v939 = vsel %vm937, %v936, 0
        %941 = vmatprep.subr.bf16.mxu0 0
        %942 = vmatpush1.bf16.msra.mxu0 %v931
        %943 = vmatprep.subr.bf16.mxu0 0
        %944 = vmatpush1.bf16.msra.mxu0 0
        %945 = vmatprep.subr.bf16.mxu0 0
        %946 = vmatpush1.bf16.msra.mxu0 0
        %947 = vmatprep.subr.bf16.mxu0 0
        %948 = vmatpush1.bf16.msra.mxu0 0
        %949 = vmatprep.subr.bf16.mxu0 0
        %950 = vmatpush1.bf16.msra.mxu0 0
        %951 = vmatprep.subr.bf16.mxu0 0
        %952 = vmatpush1.bf16.msra.mxu0 0
        %953 = vmatprep.subr.bf16.mxu0 0
        %954 = vmatpush1.bf16.msra.mxu0 0
        %955 = vmatprep.subr.bf16.mxu0 0
        %956 = vmatpush1.bf16.msra.mxu0 0
        %957 = vmatprep.subr.bf16.mxu0 0
        %958 = vmatpush1.bf16.msra.mxu0 0
        %959 = vmatprep.subr.bf16.mxu0 0
        %960 = vmatpush1.bf16.msra.mxu0 0
        %961 = vmatprep.subr.bf16.mxu0 0
        %962 = vmatpush1.bf16.msra.mxu0 0
        %963 = vmatprep.subr.bf16.mxu0 0
        %964 = vmatpush1.bf16.msra.mxu0 0
        %965 = vmatprep.subr.bf16.mxu0 0
        %966 = vmatpush1.bf16.msra.mxu0 0
        %967 = vmatprep.subr.bf16.mxu0 0
        %968 = vmatpush1.bf16.msra.mxu0 0
        %969 = vmatprep.subr.bf16.mxu0 0
        %970 = vmatpush1.bf16.msra.mxu0 0
        %971 = vmatprep.subr.bf16.mxu0 0
        %972 = vmatpush1.bf16.msra.mxu0 0
        %973 = vmatprep.mubr.bf16.mxu0 0
        %974 = vmatmul.mubr.bf16.gmra.mrb[0].mxu0 %v939
        %v975 = vpop.f32.mrb[0].mxu0
        %v976 = vadd.f32 0.0, %v975
        %v977 = vpop.f32.mrb[0].mxu0
        %v978 = vpop.f32.mrb[0].mxu0
        %v979 = vadd.f32 0.0, %v978
        %v980 = vpop.f32.mrb[0].mxu0
        %981 = vdwg.mxu0
        %982 = vst [vmem:[#allocation2] sm:$0xff] %v976
        %983 = vst [vmem:[#allocation2 + $0x18] sm:$0xff] %v979
        %v986 = vunpack.c.l.b16 %v807
        %v987 = vunpack.c.l.b16 %v808
        %v988 = vpack.c.b16 %v987, %v986
        %v990 = vsel %vm937, %v988, 0
        %992 = vmatprep.subr.bf16.mxu0 0
        %993 = vmatpush1.bf16.msra.mxu0 %v931
        %994 = vmatprep.subr.bf16.mxu0 0
        %995 = vmatpush1.bf16.msra.mxu0 0
        %996 = vmatprep.subr.bf16.mxu0 0
        %997 = vmatpush1.bf16.msra.mxu0 0
        %998 = vmatprep.subr.bf16.mxu0 0
        %999 = vmatpush1.bf16.msra.mxu0 0
        %1000 = vmatprep.subr.bf16.mxu0 0
        %1001 = vmatpush1.bf16.msra.mxu0 0
        %1002 = vmatprep.subr.bf16.mxu0 0
        %1003 = vmatpush1.bf16.msra.mxu0 0
        %1004 = vmatprep.subr.bf16.mxu0 0
        %1005 = vmatpush1.bf16.msra.mxu0 0
        %1006 = vmatprep.subr.bf16.mxu0 0
        %1007 = vmatpush1.bf16.msra.mxu0 0
        %1008 = vmatprep.subr.bf16.mxu0 0
        %1009 = vmatpush1.bf16.msra.mxu0 0
        %1010 = vmatprep.subr.bf16.mxu0 0
        %1011 = vmatpush1.bf16.msra.mxu0 0
        %1012 = vmatprep.subr.bf16.mxu0 0
        %1013 = vmatpush1.bf16.msra.mxu0 0
        %1014 = vmatprep.subr.bf16.mxu0 0
        %1015 = vmatpush1.bf16.msra.mxu0 0
        %1016 = vmatprep.subr.bf16.mxu0 0
        %1017 = vmatpush1.bf16.msra.mxu0 0
        %1018 = vmatprep.subr.bf16.mxu0 0
        %1019 = vmatpush1.bf16.msra.mxu0 0
        %1020 = vmatprep.subr.bf16.mxu0 0
        %1021 = vmatpush1.bf16.msra.mxu0 0
        %1022 = vmatprep.subr.bf16.mxu0 0
        %1023 = vmatpush1.bf16.msra.mxu0 0
        %1024 = vmatprep.mubr.bf16.mxu0 0
        %1025 = vmatmul.mubr.bf16.gmra.mrb[0].mxu0 %v990
        %v1026 = vpop.f32.mrb[0].mxu0
        %v1027 = vadd.f32 0.0, %v1026
        %v1028 = vpop.f32.mrb[0].mxu0
        %v1029 = vpop.f32.mrb[0].mxu0
        %v1030 = vadd.f32 0.0, %v1029
        %v1031 = vpop.f32.mrb[0].mxu0
        %1032 = vdwg.mxu0
        %v1033 = vpack.c.bf16 %v1030, %v1027
        %v1034 = vld [vmem:[%s667] sm:$0xf]
        %v1035 = vld [vmem:[%s667 + $0x4] sm:$0xf]
        %v1036 = vld [vmem:[%s667 + $0x8] sm:$0xf]
        %v1037 = vld [vmem:[%s667 + $0xc] sm:$0xf]
        %v1038 = vld [vmem:[%s667 + $0x10] sm:$0xf]
        %v1039 = vld [vmem:[%s667 + $0x14] sm:$0xf]
        %v1040 = vld [vmem:[%s667 + $0x18] sm:$0xf]
        %v1041 = vld [vmem:[%s667 + $0x1c] sm:$0xf]
        %v1042 = vld [vmem:[%s667 + $0x20] sm:$0xf]
        %v1043 = vld [vmem:[%s667 + $0x24] sm:$0xf]
        %v1044 = vld [vmem:[%s667 + $0x28] sm:$0xf]
        %v1045 = vld [vmem:[%s667 + $0x2c] sm:$0xf]
        %v1046 = vld [vmem:[%s667 + $0x30] sm:$0xf]
        %v1047 = vld [vmem:[%s667 + $0x34] sm:$0xf]
        %v1048 = vld [vmem:[%s667 + $0x38] sm:$0xf]
        %v1049 = vld [vmem:[%s667 + $0x3c] sm:$0xf]
        %v1050 = vld [vmem:[%s795] sm:$0x1]
        %v1052 = vlaneseq
        %v1053 = vshrl.u32 %v1052, 7
        %v1054 = vsub.s32 0, %v1053
        %v1055 = vrot.slane %v1050, %v1054
        %v1073 = vunpack.c.l.b16 %v1034
        %v1074 = vunpack.c.l.b16 %v1035
        %v1075 = vunpack.c.l.b16 %v1036
        %v1076 = vunpack.c.l.b16 %v1037
        %v1077 = vunpack.c.l.b16 %v1038
        %v1078 = vunpack.c.l.b16 %v1039
        %v1079 = vunpack.c.l.b16 %v1040
        %v1080 = vunpack.c.l.b16 %v1041
        %v1081 = vunpack.c.l.b16 %v1042
        %v1082 = vunpack.c.l.b16 %v1043
        %v1083 = vunpack.c.l.b16 %v1044
        %v1084 = vunpack.c.l.b16 %v1045
        %v1085 = vunpack.c.l.b16 %v1046
        %v1086 = vunpack.c.l.b16 %v1047
        %v1087 = vunpack.c.l.b16 %v1048
        %v1088 = vunpack.c.l.b16 %v1049
        %v1089 = vpack.c.b16 %v1074, %v1073
        %v1090 = vpack.c.b16 %v1076, %v1075
        %v1091 = vpack.c.b16 %v1078, %v1077
        %v1092 = vpack.c.b16 %v1080, %v1079
        %v1093 = vpack.c.b16 %v1082, %v1081
        %v1094 = vpack.c.b16 %v1084, %v1083
        %v1095 = vpack.c.b16 %v1086, %v1085
        %v1096 = vpack.c.b16 %v1088, %v1087
        %1105 = vmatprep.subr.bf16.mxu0 0
        %1106 = vmatpush1.bf16.msra.mxu0 %v1089
        %1107 = vmatprep.subr.bf16.mxu0 0
        %1108 = vmatpush1.bf16.msra.mxu0 %v1090
        %1109 = vmatprep.subr.bf16.mxu0 0
        %1110 = vmatpush1.bf16.msra.mxu0 %v1091
        %1111 = vmatprep.subr.bf16.mxu0 0
        %1112 = vmatpush1.bf16.msra.mxu0 %v1092
        %1113 = vmatprep.subr.bf16.mxu0 0
        %1114 = vmatpush1.bf16.msra.mxu0 %v1093
        %1115 = vmatprep.subr.bf16.mxu0 0
        %1116 = vmatpush1.bf16.msra.mxu0 %v1094
        %1117 = vmatprep.subr.bf16.mxu0 0
        %1118 = vmatpush1.bf16.msra.mxu0 %v1095
        %1119 = vmatprep.subr.bf16.mxu0 0
        %1120 = vmatpush1.bf16.msra.mxu0 %v1096
        %1121 = vmatprep.subr.bf16.mxu0 0
        %1122 = vmatpush1.bf16.msra.mxu0 0
        %1123 = vmatprep.subr.bf16.mxu0 0
        %1124 = vmatpush1.bf16.msra.mxu0 0
        %1125 = vmatprep.subr.bf16.mxu0 0
        %1126 = vmatpush1.bf16.msra.mxu0 0
        %1127 = vmatprep.subr.bf16.mxu0 0
        %1128 = vmatpush1.bf16.msra.mxu0 0
        %1129 = vmatprep.subr.bf16.mxu0 0
        %1130 = vmatpush1.bf16.msra.mxu0 0
        %1131 = vmatprep.subr.bf16.mxu0 0
        %1132 = vmatpush1.bf16.msra.mxu0 0
        %1133 = vmatprep.subr.bf16.mxu0 0
        %1134 = vmatpush1.bf16.msra.mxu0 0
        %1135 = vmatprep.subr.bf16.mxu0 0
        %1136 = vmatpush1.bf16.msra.mxu0 0
        %1137 = vmatprep.mubr.bf16.mxu0 0
        %1138 = vmatmul.mubr.bf16.gmra.mrb[0].mxu0 %v1033
        %v1139 = vpop.f32.mrb[0].mxu0
        %v1140 = vadd.f32 %v1055, %v1139
        %v1141 = vpop.f32.mrb[0].mxu0
        %v1142 = vpop.f32.mrb[0].mxu0
        %v1143 = vadd.f32 %v1055, %v1142
        %v1144 = vpop.f32.mrb[0].mxu0
        %1145 = vdwg.mxu0
        %v1146 = vmax.f32 %v1140, 0.0
        %v1147 = vmax.f32 %v1143, 0.0
        %v1148 = vpack.c.bf16 %v1147, %v1146
        %v1149 = vld [vmem:[%s676] sm:$0xf]
        %v1150 = vld [vmem:[%s676 + $0x4] sm:$0xf]
        %v1151 = vld [vmem:[%s676 + $0x8] sm:$0xf]
        %v1152 = vld [vmem:[%s676 + $0xc] sm:$0xf]
        %v1153 = vld [vmem:[%s676 + $0x10] sm:$0xf]
        %v1154 = vld [vmem:[%s676 + $0x14] sm:$0xf]
        %v1155 = vld [vmem:[%s676 + $0x18] sm:$0xf]
        %v1156 = vld [vmem:[%s676 + $0x1c] sm:$0xf]
        %v1157 = vld [vmem:[%s676 + $0x20] sm:$0xf]
        %v1158 = vld [vmem:[%s676 + $0x24] sm:$0xf]
        %v1159 = vld [vmem:[%s676 + $0x28] sm:$0xf]
        %v1160 = vld [vmem:[%s676 + $0x2c] sm:$0xf]
        %v1161 = vld [vmem:[%s676 + $0x30] sm:$0xf]
        %v1162 = vld [vmem:[%s676 + $0x34] sm:$0xf]
        %v1163 = vld [vmem:[%s676 + $0x38] sm:$0xf]
        %v1164 = vld [vmem:[%s676 + $0x3c] sm:$0xf]
        %v1165 = vld [vmem:[%s799] sm:$0x1]
        %v1167 = vlaneseq
        %v1168 = vshrl.u32 %v1167, 7
        %v1169 = vsub.s32 0, %v1168
        %v1170 = vrot.slane %v1165, %v1169
        %v1188 = vunpack.c.l.b16 %v1149
        %v1189 = vunpack.c.l.b16 %v1150
        %v1190 = vunpack.c.l.b16 %v1151
        %v1191 = vunpack.c.l.b16 %v1152
        %v1192 = vunpack.c.l.b16 %v1153
        %v1193 = vunpack.c.l.b16 %v1154
        %v1194 = vunpack.c.l.b16 %v1155
        %v1195 = vunpack.c.l.b16 %v1156
        %v1196 = vunpack.c.l.b16 %v1157
        %v1197 = vunpack.c.l.b16 %v1158
        %v1198 = vunpack.c.l.b16 %v1159
        %v1199 = vunpack.c.l.b16 %v1160
        %v1200 = vunpack.c.l.b16 %v1161
        %v1201 = vunpack.c.l.b16 %v1162
        %v1202 = vunpack.c.l.b16 %v1163
        %v1203 = vunpack.c.l.b16 %v1164
        %v1204 = vpack.c.b16 %v1189, %v1188
        %v1205 = vpack.c.b16 %v1191, %v1190
        %v1206 = vpack.c.b16 %v1193, %v1192
        %v1207 = vpack.c.b16 %v1195, %v1194
        %v1208 = vpack.c.b16 %v1197, %v1196
        %v1209 = vpack.c.b16 %v1199, %v1198
        %v1210 = vpack.c.b16 %v1201, %v1200
        %v1211 = vpack.c.b16 %v1203, %v1202
        %1220 = vmatprep.subr.bf16.mxu0 0
        %1221 = vmatpush1.bf16.msra.mxu0 %v1204
        %1222 = vmatprep.subr.bf16.mxu0 0
        %1223 = vmatpush1.bf16.msra.mxu0 %v1205
        %1224 = vmatprep.subr.bf16.mxu0 0
        %1225 = vmatpush1.bf16.msra.mxu0 %v1206
        %1226 = vmatprep.subr.bf16.mxu0 0
        %1227 = vmatpush1.bf16.msra.mxu0 %v1207
        %1228 = vmatprep.subr.bf16.mxu0 0
        %1229 = vmatpush1.bf16.msra.mxu0 %v1208
        %1230 = vmatprep.subr.bf16.mxu0 0
        %1231 = vmatpush1.bf16.msra.mxu0 %v1209
        %1232 = vmatprep.subr.bf16.mxu0 0
        %1233 = vmatpush1.bf16.msra.mxu0 %v1210
        %1234 = vmatprep.subr.bf16.mxu0 0
        %1235 = vmatpush1.bf16.msra.mxu0 %v1211
        %1236 = vmatprep.subr.bf16.mxu0 0
        %1237 = vmatpush1.bf16.msra.mxu0 0
        %1238 = vmatprep.subr.bf16.mxu0 0
        %1239 = vmatpush1.bf16.msra.mxu0 0
        %1240 = vmatprep.subr.bf16.mxu0 0
        %1241 = vmatpush1.bf16.msra.mxu0 0
        %1242 = vmatprep.subr.bf16.mxu0 0
        %1243 = vmatpush1.bf16.msra.mxu0 0
        %1244 = vmatprep.subr.bf16.mxu0 0
        %1245 = vmatpush1.bf16.msra.mxu0 0
        %1246 = vmatprep.subr.bf16.mxu0 0
        %1247 = vmatpush1.bf16.msra.mxu0 0
        %1248 = vmatprep.subr.bf16.mxu0 0
        %1249 = vmatpush1.bf16.msra.mxu0 0
        %1250 = vmatprep.subr.bf16.mxu0 0
        %1251 = vmatpush1.bf16.msra.mxu0 0
        %1252 = vmatprep.mubr.bf16.mxu0 0
        %1253 = vmatmul.mubr.bf16.gmra.mrb[0].mxu0 %v1148
        %v1254 = vpop.f32.mrb[0].mxu0
        %v1255 = vadd.f32 %v1170, %v1254
        %v1256 = vpop.f32.mrb[0].mxu0
        %v1257 = vpop.f32.mrb[0].mxu0
        %v1258 = vadd.f32 %v1170, %v1257
        %v1259 = vpop.f32.mrb[0].mxu0
        %1260 = vdwg.mxu0
        %v1261 = vmax.f32 %v1255, 0.0
        %v1262 = vmax.f32 %v1258, 0.0
        %v1263 = vpack.c.bf16 %v1262, %v1261
        %1264 = vmatprep.subr.bf16.mxu0 0
        %1265 = vmatpush1.bf16.msra.mxu0 %v1263
        %1266 = vmatprep.subr.bf16.mxu0 0
        %1267 = vmatpush1.bf16.msra.mxu0 0
        %1268 = vmatprep.subr.bf16.mxu0 0
        %1269 = vmatpush1.bf16.msra.mxu0 0
        %1270 = vmatprep.subr.bf16.mxu0 0
        %1271 = vmatpush1.bf16.msra.mxu0 0
        %1272 = vmatprep.subr.bf16.mxu0 0
        %1273 = vmatpush1.bf16.msra.mxu0 0
        %1274 = vmatprep.subr.bf16.mxu0 0
        %1275 = vmatpush1.bf16.msra.mxu0 0
        %1276 = vmatprep.subr.bf16.mxu0 0
        %1277 = vmatpush1.bf16.msra.mxu0 0
        %1278 = vmatprep.subr.bf16.mxu0 0
        %1279 = vmatpush1.bf16.msra.mxu0 0
        %1280 = vmatprep.subr.bf16.mxu0 0
        %1281 = vmatpush1.bf16.msra.mxu0 0
        %1282 = vmatprep.subr.bf16.mxu0 0
        %1283 = vmatpush1.bf16.msra.mxu0 0
        %1284 = vmatprep.subr.bf16.mxu0 0
        %1285 = vmatpush1.bf16.msra.mxu0 0
        %1286 = vmatprep.subr.bf16.mxu0 0
        %1287 = vmatpush1.bf16.msra.mxu0 0
        %1288 = vmatprep.subr.bf16.mxu0 0
        %1289 = vmatpush1.bf16.msra.mxu0 0
        %1290 = vmatprep.subr.bf16.mxu0 0
        %1291 = vmatpush1.bf16.msra.mxu0 0
        %1292 = vmatprep.subr.bf16.mxu0 0
        %1293 = vmatpush1.bf16.msra.mxu0 0
        %1294 = vmatprep.subr.bf16.mxu0 0
        %1295 = vmatpush1.bf16.msra.mxu0 0
        %1296 = vmatprep.mubr.bf16.mxu0 0
        %1297 = vmatmul.mubr.bf16.gmra.mrb[0].mxu0 %v939
        %v1298 = vpop.f32.mrb[0].mxu0
        %v1299 = vadd.f32 0.0, %v1298
        %v1300 = vpop.f32.mrb[0].mxu0
        %v1301 = vpop.f32.mrb[0].mxu0
        %v1302 = vadd.f32 0.0, %v1301
        %v1303 = vpop.f32.mrb[0].mxu0
        %1304 = vdwg.mxu0
        %1305 = vst [vmem:[#allocation2 + $0x8] sm:$0xff] %v1299
        %1306 = vst [vmem:[#allocation2 + $0x20] sm:$0xff] %v1302
        %1307 = vmatprep.subr.bf16.mxu0 0
        %1308 = vmatpush1.bf16.msra.mxu0 %v1263
        %1309 = vmatprep.subr.bf16.mxu0 0
        %1310 = vmatpush1.bf16.msra.mxu0 0
        %1311 = vmatprep.subr.bf16.mxu0 0
        %1312 = vmatpush1.bf16.msra.mxu0 0
        %1313 = vmatprep.subr.bf16.mxu0 0
        %1314 = vmatpush1.bf16.msra.mxu0 0
        %1315 = vmatprep.subr.bf16.mxu0 0
        %1316 = vmatpush1.bf16.msra.mxu0 0
        %1317 = vmatprep.subr.bf16.mxu0 0
        %1318 = vmatpush1.bf16.msra.mxu0 0
        %1319 = vmatprep.subr.bf16.mxu0 0
        %1320 = vmatpush1.bf16.msra.mxu0 0
        %1321 = vmatprep.subr.bf16.mxu0 0
        %1322 = vmatpush1.bf16.msra.mxu0 0
        %1323 = vmatprep.subr.bf16.mxu0 0
        %1324 = vmatpush1.bf16.msra.mxu0 0
        %1325 = vmatprep.subr.bf16.mxu0 0
        %1326 = vmatpush1.bf16.msra.mxu0 0
        %1327 = vmatprep.subr.bf16.mxu0 0
        %1328 = vmatpush1.bf16.msra.mxu0 0
        %1329 = vmatprep.subr.bf16.mxu0 0
        %1330 = vmatpush1.bf16.msra.mxu0 0
        %1331 = vmatprep.subr.bf16.mxu0 0
        %1332 = vmatpush1.bf16.msra.mxu0 0
        %1333 = vmatprep.subr.bf16.mxu0 0
        %1334 = vmatpush1.bf16.msra.mxu0 0
        %1335 = vmatprep.subr.bf16.mxu0 0
        %1336 = vmatpush1.bf16.msra.mxu0 0
        %1337 = vmatprep.subr.bf16.mxu0 0
        %1338 = vmatpush1.bf16.msra.mxu0 0
        %1339 = vmatprep.mubr.bf16.mxu0 0
        %1340 = vmatmul.mubr.bf16.gmra.mrb[0].mxu0 %v990
        %v1341 = vpop.f32.mrb[0].mxu0
        %v1342 = vadd.f32 0.0, %v1341
        %v1343 = vpop.f32.mrb[0].mxu0
        %v1344 = vpop.f32.mrb[0].mxu0
        %v1345 = vadd.f32 0.0, %v1344
        %v1346 = vpop.f32.mrb[0].mxu0
        %1347 = vdwg.mxu0
        %v1348 = vpack.c.bf16 %v1345, %v1342
        %s1349 = scalar_lea.vmem %s667, 64 [#allocation11]
        %v1350 = vld [vmem:[%s1349] sm:$0xf]
        %v1351 = vld [vmem:[%s1349 + $0x4] sm:$0xf]
        %v1352 = vld [vmem:[%s1349 + $0x8] sm:$0xf]
        %v1353 = vld [vmem:[%s1349 + $0xc] sm:$0xf]
        %v1354 = vld [vmem:[%s1349 + $0x10] sm:$0xf]
        %v1355 = vld [vmem:[%s1349 + $0x14] sm:$0xf]
        %v1356 = vld [vmem:[%s1349 + $0x18] sm:$0xf]
        %v1357 = vld [vmem:[%s1349 + $0x1c] sm:$0xf]
        %v1358 = vld [vmem:[%s1349 + $0x20] sm:$0xf]
        %v1359 = vld [vmem:[%s1349 + $0x24] sm:$0xf]
        %v1360 = vld [vmem:[%s1349 + $0x28] sm:$0xf]
        %v1361 = vld [vmem:[%s1349 + $0x2c] sm:$0xf]
        %v1362 = vld [vmem:[%s1349 + $0x30] sm:$0xf]
        %v1363 = vld [vmem:[%s1349 + $0x34] sm:$0xf]
        %v1364 = vld [vmem:[%s1349 + $0x38] sm:$0xf]
        %v1365 = vld [vmem:[%s1349 + $0x3c] sm:$0xf]
        %s1366 = scalar_lea.vmem %s795, 1
        %v1367 = vld [vmem:[%s1366] sm:$0x1]
        %v1369 = vlaneseq
        %v1370 = vshrl.u32 %v1369, 7
        %v1371 = vsub.s32 0, %v1370
        %v1372 = vrot.slane %v1367, %v1371
        %v1390 = vunpack.c.l.b16 %v1350
        %v1391 = vunpack.c.l.b16 %v1351
        %v1392 = vunpack.c.l.b16 %v1352
        %v1393 = vunpack.c.l.b16 %v1353
        %v1394 = vunpack.c.l.b16 %v1354
        %v1395 = vunpack.c.l.b16 %v1355
        %v1396 = vunpack.c.l.b16 %v1356
        %v1397 = vunpack.c.l.b16 %v1357
        %v1398 = vunpack.c.l.b16 %v1358
        %v1399 = vunpack.c.l.b16 %v1359
        %v1400 = vunpack.c.l.b16 %v1360
        %v1401 = vunpack.c.l.b16 %v1361
        %v1402 = vunpack.c.l.b16 %v1362
        %v1403 = vunpack.c.l.b16 %v1363
        %v1404 = vunpack.c.l.b16 %v1364
        %v1405 = vunpack.c.l.b16 %v1365
        %v1406 = vpack.c.b16 %v1391, %v1390
        %v1407 = vpack.c.b16 %v1393, %v1392
        %v1408 = vpack.c.b16 %v1395, %v1394
        %v1409 = vpack.c.b16 %v1397, %v1396
        %v1410 = vpack.c.b16 %v1399, %v1398
        %v1411 = vpack.c.b16 %v1401, %v1400
        %v1412 = vpack.c.b16 %v1403, %v1402
        %v1413 = vpack.c.b16 %v1405, %v1404
        %1422 = vmatprep.subr.bf16.mxu0 0
        %1423 = vmatpush1.bf16.msra.mxu0 %v1406
        %1424 = vmatprep.subr.bf16.mxu0 0
        %1425 = vmatpush1.bf16.msra.mxu0 %v1407
        %1426 = vmatprep.subr.bf16.mxu0 0
        %1427 = vmatpush1.bf16.msra.mxu0 %v1408
        %1428 = vmatprep.subr.bf16.mxu0 0
        %1429 = vmatpush1.bf16.msra.mxu0 %v1409
        %1430 = vmatprep.subr.bf16.mxu0 0
        %1431 = vmatpush1.bf16.msra.mxu0 %v1410
        %1432 = vmatprep.subr.bf16.mxu0 0
        %1433 = vmatpush1.bf16.msra.mxu0 %v1411
        %1434 = vmatprep.subr.bf16.mxu0 0
        %1435 = vmatpush1.bf16.msra.mxu0 %v1412
        %1436 = vmatprep.subr.bf16.mxu0 0
        %1437 = vmatpush1.bf16.msra.mxu0 %v1413
        %1438 = vmatprep.subr.bf16.mxu0 0
        %1439 = vmatpush1.bf16.msra.mxu0 0
        %1440 = vmatprep.subr.bf16.mxu0 0
        %1441 = vmatpush1.bf16.msra.mxu0 0
        %1442 = vmatprep.subr.bf16.mxu0 0
        %1443 = vmatpush1.bf16.msra.mxu0 0
        %1444 = vmatprep.subr.bf16.mxu0 0
        %1445 = vmatpush1.bf16.msra.mxu0 0
        %1446 = vmatprep.subr.bf16.mxu0 0
        %1447 = vmatpush1.bf16.msra.mxu0 0
        %1448 = vmatprep.subr.bf16.mxu0 0
        %1449 = vmatpush1.bf16.msra.mxu0 0
        %1450 = vmatprep.subr.bf16.mxu0 0
        %1451 = vmatpush1.bf16.msra.mxu0 0
        %1452 = vmatprep.subr.bf16.mxu0 0
        %1453 = vmatpush1.bf16.msra.mxu0 0
        %1454 = vmatprep.mubr.bf16.mxu0 0
        %1455 = vmatmul.mubr.bf16.gmra.mrb[0].mxu0 %v1348
        %v1456 = vpop.f32.mrb[0].mxu0
        %v1457 = vadd.f32 %v1372, %v1456
        %v1458 = vpop.f32.mrb[0].mxu0
        %v1459 = vpop.f32.mrb[0].mxu0
        %v1460 = vadd.f32 %v1372, %v1459
        %v1461 = vpop.f32.mrb[0].mxu0
        %1462 = vdwg.mxu0
        %v1463 = vmax.f32 %v1457, 0.0
        %v1464 = vmax.f32 %v1460, 0.0
        %v1465 = vpack.c.bf16 %v1464, %v1463
        %s1466 = scalar_lea.vmem %s676, 64 [#allocation12]
        %v1467 = vld [vmem:[%s1466] sm:$0xf]
        %v1468 = vld [vmem:[%s1466 + $0x4] sm:$0xf]
        %v1469 = vld [vmem:[%s1466 + $0x8] sm:$0xf]
        %v1470 = vld [vmem:[%s1466 + $0xc] sm:$0xf]
        %v1471 = vld [vmem:[%s1466 + $0x10] sm:$0xf]
        %v1472 = vld [vmem:[%s1466 + $0x14] sm:$0xf]
        %v1473 = vld [vmem:[%s1466 + $0x18] sm:$0xf]
        %v1474 = vld [vmem:[%s1466 + $0x1c] sm:$0xf]
        %v1475 = vld [vmem:[%s1466 + $0x20] sm:$0xf]
        %v1476 = vld [vmem:[%s1466 + $0x24] sm:$0xf]
        %v1477 = vld [vmem:[%s1466 + $0x28] sm:$0xf]
        %v1478 = vld [vmem:[%s1466 + $0x2c] sm:$0xf]
        %v1479 = vld [vmem:[%s1466 + $0x30] sm:$0xf]
        %v1480 = vld [vmem:[%s1466 + $0x34] sm:$0xf]
        %v1481 = vld [vmem:[%s1466 + $0x38] sm:$0xf]
        %v1482 = vld [vmem:[%s1466 + $0x3c] sm:$0xf]
        %s1483 = scalar_lea.vmem %s799, 1
        %v1484 = vld [vmem:[%s1483] sm:$0x1]
        %v1486 = vlaneseq
        %v1487 = vshrl.u32 %v1486, 7
        %v1488 = vsub.s32 0, %v1487
        %v1489 = vrot.slane %v1484, %v1488
        %v1507 = vunpack.c.l.b16 %v1467
        %v1508 = vunpack.c.l.b16 %v1468
        %v1509 = vunpack.c.l.b16 %v1469
        %v1510 = vunpack.c.l.b16 %v1470
        %v1511 = vunpack.c.l.b16 %v1471
        %v1512 = vunpack.c.l.b16 %v1472
        %v1513 = vunpack.c.l.b16 %v1473
        %v1514 = vunpack.c.l.b16 %v1474
        %v1515 = vunpack.c.l.b16 %v1475
        %v1516 = vunpack.c.l.b16 %v1476
        %v1517 = vunpack.c.l.b16 %v1477
        %v1518 = vunpack.c.l.b16 %v1478
        %v1519 = vunpack.c.l.b16 %v1479
        %v1520 = vunpack.c.l.b16 %v1480
        %v1521 = vunpack.c.l.b16 %v1481
        %v1522 = vunpack.c.l.b16 %v1482
        %v1523 = vpack.c.b16 %v1508, %v1507
        %v1524 = vpack.c.b16 %v1510, %v1509
        %v1525 = vpack.c.b16 %v1512, %v1511
        %v1526 = vpack.c.b16 %v1514, %v1513
        %v1527 = vpack.c.b16 %v1516, %v1515
        %v1528 = vpack.c.b16 %v1518, %v1517
        %v1529 = vpack.c.b16 %v1520, %v1519
        %v1530 = vpack.c.b16 %v1522, %v1521
        %1539 = vmatprep.subr.bf16.mxu0 0
        %1540 = vmatpush1.bf16.msra.mxu0 %v1523
        %1541 = vmatprep.subr.bf16.mxu0 0
        %1542 = vmatpush1.bf16.msra.mxu0 %v1524
        %1543 = vmatprep.subr.bf16.mxu0 0
        %1544 = vmatpush1.bf16.msra.mxu0 %v1525
        %1545 = vmatprep.subr.bf16.mxu0 0
        %1546 = vmatpush1.bf16.msra.mxu0 %v1526
        %1547 = vmatprep.subr.bf16.mxu0 0
        %1548 = vmatpush1.bf16.msra.mxu0 %v1527
        %1549 = vmatprep.subr.bf16.mxu0 0
        %1550 = vmatpush1.bf16.msra.mxu0 %v1528
        %1551 = vmatprep.subr.bf16.mxu0 0
        %1552 = vmatpush1.bf16.msra.mxu0 %v1529
        %1553 = vmatprep.subr.bf16.mxu0 0
        %1554 = vmatpush1.bf16.msra.mxu0 %v1530
        %1555 = vmatprep.subr.bf16.mxu0 0
        %1556 = vmatpush1.bf16.msra.mxu0 0
        %1557 = vmatprep.subr.bf16.mxu0 0
        %1558 = vmatpush1.bf16.msra.mxu0 0
        %1559 = vmatprep.subr.bf16.mxu0 0
        %1560 = vmatpush1.bf16.msra.mxu0 0
        %1561 = vmatprep.subr.bf16.mxu0 0
        %1562 = vmatpush1.bf16.msra.mxu0 0
        %1563 = vmatprep.subr.bf16.mxu0 0
        %1564 = vmatpush1.bf16.msra.mxu0 0
        %1565 = vmatprep.subr.bf16.mxu0 0
        %1566 = vmatpush1.bf16.msra.mxu0 0
        %1567 = vmatprep.subr.bf16.mxu0 0
        %1568 = vmatpush1.bf16.msra.mxu0 0
        %1569 = vmatprep.subr.bf16.mxu0 0
        %1570 = vmatpush1.bf16.msra.mxu0 0
        %1571 = vmatprep.mubr.bf16.mxu0 0
        %1572 = vmatmul.mubr.bf16.gmra.mrb[0].mxu0 %v1465
        %v1573 = vpop.f32.mrb[0].mxu0
        %v1574 = vadd.f32 %v1489, %v1573
        %v1575 = vpop.f32.mrb[0].mxu0
        %v1576 = vpop.f32.mrb[0].mxu0
        %v1577 = vadd.f32 %v1489, %v1576
        %v1578 = vpop.f32.mrb[0].mxu0
        %1579 = vdwg.mxu0
        %v1580 = vadd.f32 %v1574, %v925
        %v1581 = vadd.f32 %v1577, %v928
        %v1582 = vmax.f32 %v1580, 0.0
        %v1583 = vmax.f32 %v1581, 0.0
        %v1584 = vpack.c.bf16 %v1583, %v1582
        %1585 = vmatprep.subr.bf16.mxu0 0
        %1586 = vmatpush1.bf16.msra.mxu0 %v1584
        %1587 = vmatprep.subr.bf16.mxu0 0
        %1588 = vmatpush1.bf16.msra.mxu0 0
        %1589 = vmatprep.subr.bf16.mxu0 0
        %1590 = vmatpush1.bf16.msra.mxu0 0
        %1591 = vmatprep.subr.bf16.mxu0 0
        %1592 = vmatpush1.bf16.msra.mxu0 0
        %1593 = vmatprep.subr.bf16.mxu0 0
        %1594 = vmatpush1.bf16.msra.mxu0 0
        %1595 = vmatprep.subr.bf16.mxu0 0
        %1596 = vmatpush1.bf16.msra.mxu0 0
        %1597 = vmatprep.subr.bf16.mxu0 0
        %1598 = vmatpush1.bf16.msra.mxu0 0
        %1599 = vmatprep.subr.bf16.mxu0 0
        %1600 = vmatpush1.bf16.msra.mxu0 0
        %1601 = vmatprep.subr.bf16.mxu0 0
        %1602 = vmatpush1.bf16.msra.mxu0 0
        %1603 = vmatprep.subr.bf16.mxu0 0
        %1604 = vmatpush1.bf16.msra.mxu0 0
        %1605 = vmatprep.subr.bf16.mxu0 0
        %1606 = vmatpush1.bf16.msra.mxu0 0
        %1607 = vmatprep.subr.bf16.mxu0 0
        %1608 = vmatpush1.bf16.msra.mxu0 0
        %1609 = vmatprep.subr.bf16.mxu0 0
        %1610 = vmatpush1.bf16.msra.mxu0 0
        %1611 = vmatprep.subr.bf16.mxu0 0
        %1612 = vmatpush1.bf16.msra.mxu0 0
        %1613 = vmatprep.subr.bf16.mxu0 0
        %1614 = vmatpush1.bf16.msra.mxu0 0
        %1615 = vmatprep.subr.bf16.mxu0 0
        %1616 = vmatpush1.bf16.msra.mxu0 0
        %1617 = vmatprep.mubr.bf16.mxu0 0
        %1618 = vmatmul.mubr.bf16.gmra.mrb[0].mxu0 %v939
        %v1619 = vpop.f32.mrb[0].mxu0
        %v1620 = vadd.f32 0.0, %v1619
        %v1621 = vpop.f32.mrb[0].mxu0
        %v1622 = vpop.f32.mrb[0].mxu0
        %v1623 = vadd.f32 0.0, %v1622
        %v1624 = vpop.f32.mrb[0].mxu0
        %1625 = vdwg.mxu0
        %1626 = vst [vmem:[#allocation2 + $0x10] sm:$0xff] %v1620
        %1627 = vst [vmem:[#allocation2 + $0x28] sm:$0xff] %v1623
        %v1628 = vld [vmem:[#allocation2] sm:$0xff]
        %v1629 = vld [vmem:[#allocation2 + $0x8] sm:$0xff]
        %v1630 = vld [vmem:[#allocation2 + $0x10] sm:$0xff]
        %v1631 = vld [vmem:[#allocation2 + $0x18] sm:$0xff]
        %v1632 = vld [vmem:[#allocation2 + $0x20] sm:$0xff]
        %v1633 = vld [vmem:[#allocation2 + $0x28] sm:$0xff]
        %v1634 = vpack.c.bf16 %v1631, %v1628
        %v1635 = vpack.c.bf16 %v1632, %v1629
        %v1636 = vpack.c.bf16 %v1633, %v1630
        %v1637 = vld [vmem:[%s685] sm:$0xf]
        %v1638 = vld [vmem:[%s685 + $0x4] sm:$0xf]
        %v1639 = vld [vmem:[%s685 + $0x8] sm:$0xf]
        %v1640 = vld [vmem:[%s685 + $0xc] sm:$0xf]
        %v1641 = vld [vmem:[%s685 + $0x10] sm:$0xf]
        %v1642 = vld [vmem:[%s685 + $0x14] sm:$0xf]
        %v1643 = vld [vmem:[%s685 + $0x18] sm:$0xf]
        %v1644 = vld [vmem:[%s685 + $0x1c] sm:$0xf]
        %v1645 = vld [vmem:[%s685 + $0x20] sm:$0xf]
        %v1646 = vld [vmem:[%s685 + $0x24] sm:$0xf]
        %v1647 = vld [vmem:[%s685 + $0x28] sm:$0xf]
        %v1648 = vld [vmem:[%s685 + $0x2c] sm:$0xf]
        %v1649 = vld [vmem:[%s685 + $0x30] sm:$0xf]
        %v1650 = vld [vmem:[%s685 + $0x34] sm:$0xf]
        %v1651 = vld [vmem:[%s685 + $0x38] sm:$0xf]
        %v1652 = vld [vmem:[%s685 + $0x3c] sm:$0xf]
        %v1653 = vld [vmem:[%s685 + $0x40] sm:$0xf]
        %v1654 = vld [vmem:[%s685 + $0x44] sm:$0xf]
        %v1655 = vld [vmem:[%s685 + $0x48] sm:$0xf]
        %v1656 = vld [vmem:[%s685 + $0x4c] sm:$0xf]
        %v1657 = vld [vmem:[%s685 + $0x50] sm:$0xf]
        %v1658 = vld [vmem:[%s685 + $0x54] sm:$0xf]
        %v1659 = vld [vmem:[%s685 + $0x58] sm:$0xf]
        %v1660 = vld [vmem:[%s685 + $0x5c] sm:$0xf]
        %v1661 = vld [vmem:[%s685 + $0x60] sm:$0xf]
        %v1662 = vld [vmem:[%s685 + $0x64] sm:$0xf]
        %v1663 = vld [vmem:[%s685 + $0x68] sm:$0xf]
        %v1664 = vld [vmem:[%s685 + $0x6c] sm:$0xf]
        %v1665 = vld [vmem:[%s685 + $0x70] sm:$0xf]
        %v1666 = vld [vmem:[%s685 + $0x74] sm:$0xf]
        %v1667 = vld [vmem:[%s685 + $0x78] sm:$0xf]
        %v1668 = vld [vmem:[%s685 + $0x7c] sm:$0xf]
        %v1669 = vld [vmem:[%s685 + $0x80] sm:$0xf]
        %v1670 = vld [vmem:[%s685 + $0x84] sm:$0xf]
        %v1671 = vld [vmem:[%s685 + $0x88] sm:$0xf]
        %v1672 = vld [vmem:[%s685 + $0x8c] sm:$0xf]
        %v1673 = vld [vmem:[%s685 + $0x90] sm:$0xf]
        %v1674 = vld [vmem:[%s685 + $0x94] sm:$0xf]
        %v1675 = vld [vmem:[%s685 + $0x98] sm:$0xf]
        %v1676 = vld [vmem:[%s685 + $0x9c] sm:$0xf]
        %v1677 = vld [vmem:[%s685 + $0xa0] sm:$0xf]
        %v1678 = vld [vmem:[%s685 + $0xa4] sm:$0xf]
        %v1679 = vld [vmem:[%s685 + $0xa8] sm:$0xf]
        %v1680 = vld [vmem:[%s685 + $0xac] sm:$0xf]
        %v1681 = vld [vmem:[%s685 + $0xb0] sm:$0xf]
        %v1682 = vld [vmem:[%s685 + $0xb4] sm:$0xf]
        %v1683 = vld [vmem:[%s685 + $0xb8] sm:$0xf]
        %v1684 = vld [vmem:[%s685 + $0xbc] sm:$0xf]
        %v1685 = vld [vmem:[%s802] sm:$0x1]
        %v1687 = vlaneseq
        %v1688 = vshrl.u32 %v1687, 7
        %v1689 = vsub.s32 0, %v1688
        %v1690 = vrot.slane %v1685, %v1689
        %v1740 = vunpack.c.l.b16 %v1637
        %v1741 = vunpack.c.l.b16 %v1638
        %v1742 = vunpack.c.l.b16 %v1639
        %v1743 = vunpack.c.l.b16 %v1640
        %v1744 = vunpack.c.l.b16 %v1641
        %v1745 = vunpack.c.l.b16 %v1642
        %v1746 = vunpack.c.l.b16 %v1643
        %v1747 = vunpack.c.l.b16 %v1644
        %v1748 = vunpack.c.l.b16 %v1645
        %v1749 = vunpack.c.l.b16 %v1646
        %v1750 = vunpack.c.l.b16 %v1647
        %v1751 = vunpack.c.l.b16 %v1648
        %v1752 = vunpack.c.l.b16 %v1649
        %v1753 = vunpack.c.l.b16 %v1650
        %v1754 = vunpack.c.l.b16 %v1651
        %v1755 = vunpack.c.l.b16 %v1652
        %v1756 = vunpack.c.l.b16 %v1653
        %v1757 = vunpack.c.l.b16 %v1654
        %v1758 = vunpack.c.l.b16 %v1655
        %v1759 = vunpack.c.l.b16 %v1656
        %v1760 = vunpack.c.l.b16 %v1657
        %v1761 = vunpack.c.l.b16 %v1658
        %v1762 = vunpack.c.l.b16 %v1659
        %v1763 = vunpack.c.l.b16 %v1660
        %v1764 = vunpack.c.l.b16 %v1661
        %v1765 = vunpack.c.l.b16 %v1662
        %v1766 = vunpack.c.l.b16 %v1663
        %v1767 = vunpack.c.l.b16 %v1664
        %v1768 = vunpack.c.l.b16 %v1665
        %v1769 = vunpack.c.l.b16 %v1666
        %v1770 = vunpack.c.l.b16 %v1667
        %v1771 = vunpack.c.l.b16 %v1668
        %v1772 = vunpack.c.l.b16 %v1669
        %v1773 = vunpack.c.l.b16 %v1670
        %v1774 = vunpack.c.l.b16 %v1671
        %v1775 = vunpack.c.l.b16 %v1672
        %v1776 = vunpack.c.l.b16 %v1673
        %v1777 = vunpack.c.l.b16 %v1674
        %v1778 = vunpack.c.l.b16 %v1675
        %v1779 = vunpack.c.l.b16 %v1676
        %v1780 = vunpack.c.l.b16 %v1677
        %v1781 = vunpack.c.l.b16 %v1678
        %v1782 = vunpack.c.l.b16 %v1679
        %v1783 = vunpack.c.l.b16 %v1680
        %v1784 = vunpack.c.l.b16 %v1681
        %v1785 = vunpack.c.l.b16 %v1682
        %v1786 = vunpack.c.l.b16 %v1683
        %v1787 = vunpack.c.l.b16 %v1684
        %v1788 = vpack.c.b16 %v1741, %v1740
        %v1789 = vpack.c.b16 %v1743, %v1742
        %v1790 = vpack.c.b16 %v1745, %v1744
        %v1791 = vpack.c.b16 %v1747, %v1746
        %v1792 = vpack.c.b16 %v1749, %v1748
        %v1793 = vpack.c.b16 %v1751, %v1750
        %v1794 = vpack.c.b16 %v1753, %v1752
        %v1795 = vpack.c.b16 %v1755, %v1754
        %v1796 = vpack.c.b16 %v1757, %v1756
        %v1797 = vpack.c.b16 %v1759, %v1758
        %v1798 = vpack.c.b16 %v1761, %v1760
        %v1799 = vpack.c.b16 %v1763, %v1762
        %v1800 = vpack.c.b16 %v1765, %v1764
        %v1801 = vpack.c.b16 %v1767, %v1766
        %v1802 = vpack.c.b16 %v1769, %v1768
        %v1803 = vpack.c.b16 %v1771, %v1770
        %v1804 = vpack.c.b16 %v1773, %v1772
        %v1805 = vpack.c.b16 %v1775, %v1774
        %v1806 = vpack.c.b16 %v1777, %v1776
        %v1807 = vpack.c.b16 %v1779, %v1778
        %v1808 = vpack.c.b16 %v1781, %v1780
        %v1809 = vpack.c.b16 %v1783, %v1782
        %v1810 = vpack.c.b16 %v1785, %v1784
        %v1811 = vpack.c.b16 %v1787, %v1786
        %1836 = vmatprep.subr.bf16.mxu0 0
        %1837 = vmatpush1.bf16.msra.mxu0 %v1788
        %1838 = vmatprep.subr.bf16.mxu0 0
        %1839 = vmatpush1.bf16.msra.mxu0 %v1789
        %1840 = vmatprep.subr.bf16.mxu0 0
        %1841 = vmatpush1.bf16.msra.mxu0 %v1790
        %1842 = vmatprep.subr.bf16.mxu0 0
        %1843 = vmatpush1.bf16.msra.mxu0 %v1791
        %1844 = vmatprep.subr.bf16.mxu0 0
        %1845 = vmatpush1.bf16.msra.mxu0 %v1792
        %1846 = vmatprep.subr.bf16.mxu0 0
        %1847 = vmatpush1.bf16.msra.mxu0 %v1793
        %1848 = vmatprep.subr.bf16.mxu0 0
        %1849 = vmatpush1.bf16.msra.mxu0 %v1794
        %1850 = vmatprep.subr.bf16.mxu0 0
        %1851 = vmatpush1.bf16.msra.mxu0 %v1795
        %1852 = vmatprep.subr.bf16.mxu0 0
        %1853 = vmatpush1.bf16.msra.mxu0 %v1796
        %1854 = vmatprep.subr.bf16.mxu0 0
        %1855 = vmatpush1.bf16.msra.mxu0 %v1797
        %1856 = vmatprep.subr.bf16.mxu0 0
        %1857 = vmatpush1.bf16.msra.mxu0 %v1798
        %1858 = vmatprep.subr.bf16.mxu0 0
        %1859 = vmatpush1.bf16.msra.mxu0 %v1799
        %1860 = vmatprep.subr.bf16.mxu0 0
        %1861 = vmatpush1.bf16.msra.mxu0 %v1800
        %1862 = vmatprep.subr.bf16.mxu0 0
        %1863 = vmatpush1.bf16.msra.mxu0 %v1801
        %1864 = vmatprep.subr.bf16.mxu0 0
        %1865 = vmatpush1.bf16.msra.mxu0 %v1802
        %1866 = vmatprep.subr.bf16.mxu0 0
        %1867 = vmatpush1.bf16.msra.mxu0 %v1803
        %1868 = vmatprep.mubr.bf16.mxu0 %v1635
        %1869 = vmatmul.mubr.bf16.gmra.mrb[0].mxu0 %v1634
        %v1870 = vpop.f32.mrb[0].mxu0
        %v1871 = vadd.f32 %v1690, %v1870
        %v1872 = vpop.f32.mrb[0].mxu0
        %v1873 = vpop.f32.mrb[0].mxu0
        %v1874 = vadd.f32 %v1690, %v1873
        %v1875 = vpop.f32.mrb[0].mxu0
        %1876 = vdwg.mxu0
        %1877 = vmatprep.subr.bf16.mxu0 0
        %1878 = vmatpush1.bf16.msra.mxu0 %v1804
        %1879 = vmatprep.subr.bf16.mxu0 0
        %1880 = vmatpush1.bf16.msra.mxu0 %v1805
        %1881 = vmatprep.subr.bf16.mxu0 0
        %1882 = vmatpush1.bf16.msra.mxu0 %v1806
        %1883 = vmatprep.subr.bf16.mxu0 0
        %1884 = vmatpush1.bf16.msra.mxu0 %v1807
        %1885 = vmatprep.subr.bf16.mxu0 0
        %1886 = vmatpush1.bf16.msra.mxu0 %v1808
        %1887 = vmatprep.subr.bf16.mxu0 0
        %1888 = vmatpush1.bf16.msra.mxu0 %v1809
        %1889 = vmatprep.subr.bf16.mxu0 0
        %1890 = vmatpush1.bf16.msra.mxu0 %v1810
        %1891 = vmatprep.subr.bf16.mxu0 0
        %1892 = vmatpush1.bf16.msra.mxu0 %v1811
        %1893 = vmatprep.subr.bf16.mxu0 0
        %1894 = vmatpush1.bf16.msra.mxu0 0
        %1895 = vmatprep.subr.bf16.mxu0 0
        %1896 = vmatpush1.bf16.msra.mxu0 0
        %1897 = vmatprep.subr.bf16.mxu0 0
        %1898 = vmatpush1.bf16.msra.mxu0 0
        %1899 = vmatprep.subr.bf16.mxu0 0
        %1900 = vmatpush1.bf16.msra.mxu0 0
        %1901 = vmatprep.subr.bf16.mxu0 0
        %1902 = vmatpush1.bf16.msra.mxu0 0
        %1903 = vmatprep.subr.bf16.mxu0 0
        %1904 = vmatpush1.bf16.msra.mxu0 0
        %1905 = vmatprep.subr.bf16.mxu0 0
        %1906 = vmatpush1.bf16.msra.mxu0 0
        %1907 = vmatprep.subr.bf16.mxu0 0
        %1908 = vmatpush1.bf16.msra.mxu0 0
        %1909 = vmatprep.mubr.bf16.mxu0 0
        %1910 = vmatmul.mubr.bf16.gmra.mrb[0].mxu0 %v1636
        %v1911 = vpop.f32.mrb[0].mxu0
        %v1912 = vadd.f32 %v1871, %v1911
        %v1913 = vpop.f32.mrb[0].mxu0
        %v1914 = vpop.f32.mrb[0].mxu0
        %v1915 = vadd.f32 %v1874, %v1914
        %v1916 = vpop.f32.mrb[0].mxu0
        %1917 = vdwg.mxu0
        %v1918 = vmax.f32 %v1912, 0.0
        %v1919 = vmax.f32 %v1915, 0.0
        %v1920 = vpack.c.bf16 %v1919, %v1918
        %v1921 = vld [vmem:[%s694] sm:$0xf]
        %v1922 = vld [vmem:[%s694 + $0x4] sm:$0xf]
        %v1923 = vld [vmem:[%s694 + $0x8] sm:$0xf]
        %v1924 = vld [vmem:[%s694 + $0xc] sm:$0xf]
        %v1925 = vld [vmem:[%s694 + $0x10] sm:$0xf]
        %v1926 = vld [vmem:[%s694 + $0x14] sm:$0xf]
        %v1927 = vld [vmem:[%s694 + $0x18] sm:$0xf]
        %v1928 = vld [vmem:[%s694 + $0x1c] sm:$0xf]
        %v1929 = vld [vmem:[%s694 + $0x20] sm:$0xf]
        %v1930 = vld [vmem:[%s694 + $0x24] sm:$0xf]
        %v1931 = vld [vmem:[%s694 + $0x28] sm:$0xf]
        %v1932 = vld [vmem:[%s694 + $0x2c] sm:$0xf]
        %v1933 = vld [vmem:[%s694 + $0x30] sm:$0xf]
        %v1934 = vld [vmem:[%s694 + $0x34] sm:$0xf]
        %v1935 = vld [vmem:[%s694 + $0x38] sm:$0xf]
        %v1936 = vld [vmem:[%s694 + $0x3c] sm:$0xf]
        %v1937 = vld [vmem:[%s805] sm:$0x1]
        %v1939 = vlaneseq
        %v1940 = vshrl.u32 %v1939, 7
        %v1941 = vsub.s32 0, %v1940
        %v1942 = vrot.slane %v1937, %v1941
        %v1960 = vunpack.c.l.b16 %v1921
        %v1961 = vunpack.c.l.b16 %v1922
        %v1962 = vunpack.c.l.b16 %v1923
        %v1963 = vunpack.c.l.b16 %v1924
        %v1964 = vunpack.c.l.b16 %v1925
        %v1965 = vunpack.c.l.b16 %v1926
        %v1966 = vunpack.c.l.b16 %v1927
        %v1967 = vunpack.c.l.b16 %v1928
        %v1968 = vunpack.c.l.b16 %v1929
        %v1969 = vunpack.c.l.b16 %v1930
        %v1970 = vunpack.c.l.b16 %v1931
        %v1971 = vunpack.c.l.b16 %v1932
        %v1972 = vunpack.c.l.b16 %v1933
        %v1973 = vunpack.c.l.b16 %v1934
        %v1974 = vunpack.c.l.b16 %v1935
        %v1975 = vunpack.c.l.b16 %v1936
        %v1976 = vpack.c.b16 %v1961, %v1960
        %v1977 = vpack.c.b16 %v1963, %v1962
        %v1978 = vpack.c.b16 %v1965, %v1964
        %v1979 = vpack.c.b16 %v1967, %v1966
        %v1980 = vpack.c.b16 %v1969, %v1968
        %v1981 = vpack.c.b16 %v1971, %v1970
        %v1982 = vpack.c.b16 %v1973, %v1972
        %v1983 = vpack.c.b16 %v1975, %v1974
        %1992 = vmatprep.subr.bf16.mxu0 0
        %1993 = vmatpush1.bf16.msra.mxu0 %v1976
        %1994 = vmatprep.subr.bf16.mxu0 0
        %1995 = vmatpush1.bf16.msra.mxu0 %v1977
        %1996 = vmatprep.subr.bf16.mxu0 0
        %1997 = vmatpush1.bf16.msra.mxu0 %v1978
        %1998 = vmatprep.subr.bf16.mxu0 0
        %1999 = vmatpush1.bf16.msra.mxu0 %v1979
        %2000 = vmatprep.subr.bf16.mxu0 0
        %2001 = vmatpush1.bf16.msra.mxu0 %v1980
        %2002 = vmatprep.subr.bf16.mxu0 0
        %2003 = vmatpush1.bf16.msra.mxu0 %v1981
        %2004 = vmatprep.subr.bf16.mxu0 0
        %2005 = vmatpush1.bf16.msra.mxu0 %v1982
        %2006 = vmatprep.subr.bf16.mxu0 0
        %2007 = vmatpush1.bf16.msra.mxu0 %v1983
        %2008 = vmatprep.subr.bf16.mxu0 0
        %2009 = vmatpush1.bf16.msra.mxu0 0
        %2010 = vmatprep.subr.bf16.mxu0 0
        %2011 = vmatpush1.bf16.msra.mxu0 0
        %2012 = vmatprep.subr.bf16.mxu0 0
        %2013 = vmatpush1.bf16.msra.mxu0 0
        %2014 = vmatprep.subr.bf16.mxu0 0
        %2015 = vmatpush1.bf16.msra.mxu0 0
        %2016 = vmatprep.subr.bf16.mxu0 0
        %2017 = vmatpush1.bf16.msra.mxu0 0
        %2018 = vmatprep.subr.bf16.mxu0 0
        %2019 = vmatpush1.bf16.msra.mxu0 0
        %2020 = vmatprep.subr.bf16.mxu0 0
        %2021 = vmatpush1.bf16.msra.mxu0 0
        %2022 = vmatprep.subr.bf16.mxu0 0
        %2023 = vmatpush1.bf16.msra.mxu0 0
        %2024 = vmatprep.mubr.bf16.mxu0 0
        %2025 = vmatmul.mubr.bf16.gmra.mrb[0].mxu0 %v1920
        %v2026 = vpop.f32.mrb[0].mxu0
        %v2027 = vadd.f32 %v1942, %v2026
        %v2028 = vpop.f32.mrb[0].mxu0
        %v2029 = vpop.f32.mrb[0].mxu0
        %v2030 = vadd.f32 %v1942, %v2029
        %v2031 = vpop.f32.mrb[0].mxu0
        %2032 = vdwg.mxu0
        %2033 = vst [vmem:[%s788] sm:$0xff] %v2027
        %2034 = vst [vmem:[%s788 + $0x8] sm:$0xff] %v2030
        %s2035 = sand.u32 %s388, 1
        %s2036 = scalar_lea.sflag [#allocation5], %s2035
        %s2037 = sand.u32 %s388, 1
        %s2038 = smul.addr %s2037, 16
        %s2039 = scalar_lea.vmem [#allocation17], %s2038
        // Predicated region
        $region105: #{tpu_custom_call.1} parent=71 // pred_check
          %p2040 = pneg %p398
        $region106: #{tpu_custom_call.1} parent=71 // pred_check_branch
          %2042 = sbr.rel (%p2040) target = $region108
        $region107: #{tpu_custom_call.1} parent=71 // pred_region
          %s2044 = ssub.s32 256, 256
          %2045 = vsyncadd %s2036, %s2044
          %s2046 = smul.addr %s42, 2
          %s2047 = smul.addr %s2046, 128
          %s2048 = scalar_lea.hbm %s13, %s2047
          %s2049 = sshll.u32 %s2039, 4
          %s2050 = int_to_ptr.vmem [resolvable:$true] %s2049
          %2055 = dma.vmem_to_hbm [thread:$0]  %s2050, 256, %s2048, %s2036, 128, 128, 8
        $region108: #{tpu_custom_call.1} parent=71 // pred_fallthru
          _
      $region72: #{tpu_custom_call.1} parent=5 // pred_fallthru
        _
      %p2056 = scmp.le.s32.totalorder 2, %s37
      // Predicated region
      $region109: #{tpu_custom_call.1} parent=5 // pred_check
        %p2057 = pneg %p2056
      $region110: #{tpu_custom_call.1} parent=5 // pred_check_branch
        %2059 = sbr.rel (%p2057) target = $region112
      $region111: #{tpu_custom_call.1} parent=5 // pred_region
        %s2060 = ssub.s32 %s37, 2
        // Predicated region
        $region113: #{tpu_custom_call.1} parent=111 // pred_check
          %p2061 = pneg %p404
        $region114: #{tpu_custom_call.1} parent=111 // pred_check_branch
          %2063 = sbr.rel (%p2061) target = $region116
        $region115: #{tpu_custom_call.1} parent=111 // pred_region
          %s2064 = sand.u32 %s389, 1
          %s2065 = scalar_lea.sflag [#allocation5], %s2064
          %s2066 = sand.u32 %s389, 1
          %s2067 = smul.addr %s2066, 16
          %s2068 = scalar_lea.vmem [#allocation17], %s2067
          %2069 = dma.done %s2065, 256
        $region116: #{tpu_custom_call.1} parent=111 // pred_fallthru
          _
      $region112: #{tpu_custom_call.1} parent=5 // pred_fallthru
        _
    $region6: #{tpu_custom_call.1} parent=1 // loop_footer
      %s41 = sadd.s32 1, %s37
    $region7: #{tpu_custom_call.1} parent=1 // loop_footer_branch
      %36 = sbr.rel target = $region3
    $region8: #{tpu_custom_call.1} parent=1 // loop_exit
      _
    %2070 = vsyncpa [#allocation4], 1
    %s2071 = scalar_lea.sflag [#allocation4], 1
    %2072 = vsyncpa %s2071, 1
    %2073 = vsyncpa [#allocation7], 1
    %s2074 = scalar_lea.sflag [#allocation7], 1
    %2075 = vsyncpa %s2074, 1
    %2076 = vsyncpa [#allocation10], 1
    %s2077 = scalar_lea.sflag [#allocation10], 1
    %2078 = vsyncpa %s2077, 1
    %2079 = vsyncpa [#allocation13], 1
    %s2080 = scalar_lea.sflag [#allocation13], 1
    %2081 = vsyncpa %s2080, 1
    %2082 = vsyncpa [#allocation16], 1
    %s2083 = scalar_lea.sflag [#allocation16], 1
    %2084 = vsyncpa %s2083, 1
    %2085 = vsyncpa [#allocation5], 1
    %s2086 = scalar_lea.sflag [#allocation5], 1
    %2087 = vsyncpa %s2086, 1

</llo_original>
